<compile_context>
chip_gen: v6e
topology: v6e:2x2x1
jax: 0.10.0
libtpu: 0.0.40
codegen_flags: <defaults>
</compile_context>

<pallas_src>
import jax
import jax.numpy as jnp
from jax.experimental import pallas as pl
from jax.experimental.pallas import tpu as pltpu


def _round_up(x, m):
    return ((x + m - 1) // m) * m


def _pad2(a, target_shape):
    pads = [(0, t - s) for s, t in zip(a.shape, target_shape)]
    if all(p == (0, 0) for p in pads):
        return a
    return jnp.pad(a, pads)


def autoencoder_kernel(x_ref, w1_ref, b1_ref, w2_ref, b2_ref, o_ref):
    # Encoder: [tm, Dp](bf16) @ [Dp, Hp](bf16) -> f32 accumulation on the MXU.
    h = jnp.dot(x_ref[...], w1_ref[...], preferred_element_type=jnp.float32)
    # Bias add + ReLU stay in f32; they sit in otherwise-idle VALU slots.
    h = jnp.maximum(h + b1_ref[...], 0.0)
    # Decoder: bf16 operands, f32 accumulation. h (<= 256x128 f32 = 32 vregs)
    # stays live in vregs; for HIDDEN > ~256 it should be staged through a VMEM
    # scratch instead to avoid spills.
    y = jnp.dot(h.astype(jnp.bfloat16), w2_ref[...],
                preferred_element_type=jnp.float32)
    o_ref[...] = (y + b2_ref[...]).astype(o_ref.dtype)


def _build_call(Bp, Dp, Hp, tm, single_buffer_weights):
    nb = Bp // tm
    const_kwargs = {}
    if single_buffer_weights:
        # Weights / biases have a constant block index across the batch grid:
        # single-buffer them (no useless double-buffer copy / re-DMA).
        const_kwargs = dict(pipeline_mode=pl.Buffered(1))

    in_specs = [
        pl.BlockSpec((tm, Dp), lambda i: (i, 0)),                    # x tile
        pl.BlockSpec((Dp, Hp), lambda i: (0, 0), **const_kwargs),    # W1 (resident)
        pl.BlockSpec((1, Hp), lambda i: (0, 0), **const_kwargs),     # b1
        pl.BlockSpec((Hp, Dp), lambda i: (0, 0), **const_kwargs),    # W2 (resident)
        pl.BlockSpec((1, Dp), lambda i: (0, 0), **const_kwargs),     # b2
    ]
    out_specs = pl.BlockSpec((tm, Dp), lambda i: (i, 0))

    # TODO(synk): for very large D on v7x (64 MiB VMEM), the D/K axis should be
    # tiled with a f32 VMEM accumulator instead of keeping both weights resident.
    return pl.pallas_call(
        autoencoder_kernel,
        out_shape=jax.ShapeDtypeStruct((Bp, Dp), jnp.float32),
        grid=(nb,),
        in_specs=in_specs,
        out_specs=out_specs,
        compiler_params=pltpu.CompilerParams(
            # Batch tiles are independent -> sharded across both TensorCores on
            # v7x; neutral on single-TC v5e/v6e.
            dimension_semantics=("parallel",),
        ),
    )


def torch_model_forward(x_nchw, w1, b1, w2, b2, *, tm=None):
    """Forward pass of TorchModel wrapping an MLP autoencoder.

    x_nchw: [B, C, H, W] f32; w1: [D, Hdim]; b1: [1, Hdim]; w2: [Hdim, D];
    b2: [1, D]. Returns [B, C, H, W] f32 reconstruction.
    """
    B, C, H, W = x_nchw.shape
    D = C * H * W
    Hdim = w1.shape[1]

    # Lane-align feature dims (multiple of 128 -> unmasked output stores) and
    # tile/pad the batch dim (multiple of 8 sublanes, up to 256-row MXU tiles).
    Dp = _round_up(D, 128)
    Hp = _round_up(Hdim, 128)
    if tm is None:
        tm = min(256, _round_up(B, 8))
    Bp = _round_up(B, tm)

    x = x_nchw.reshape(B, D)
    # bf16 operands halve weight/input HBM bytes and hit the native bf16 MXU
    # rate; biases and accumulation stay f32.
    xp = _pad2(x, (Bp, Dp)).astype(jnp.bfloat16)
    w1p = _pad2(w1, (Dp, Hp)).astype(jnp.bfloat16)
    b1p = _pad2(b1.reshape(1, Hdim), (1, Hp)).astype(jnp.float32)
    w2p = _pad2(w2, (Hp, Dp)).astype(jnp.bfloat16)
    b2p = _pad2(b2.reshape(1, D), (1, Dp)).astype(jnp.float32)

    args = (xp, w1p, b1p, w2p, b2p)
    try:
        out_p = _build_call(Bp, Dp, Hp, tm, single_buffer_weights=True)(*args)
    except Exception:
        # Fallback for Pallas builds without BlockSpec(pipeline_mode=...):
        # default double-buffering of the constant blocks (correct, more VMEM).
        out_p = _build_call(Bp, Dp, Hp, tm, single_buffer_weights=False)(*args)

    return out_p[:B, :D].reshape(B, C, H, W)


# TODO(synk): TorchModel's training/eval/saving machinery (fit, evaluate, save,
# data_parallel, callbacks) is host-side orchestration with no Pallas equivalent;
# only forward() is implemented here.


if __name__ == "__main__":
    # Small shapes consistent with an image autoencoder input.
    B, C, Himg, Wimg = 2, 4, 16, 16
    D = C * Himg * Wimg          # 1024 (already a multiple of 128)
    HIDDEN = 128                 # lane-aligned hidden width

    key = jax.random.PRNGKey(0)
    kx, kw1, kw2 = jax.random.split(key, 3)

    x = jax.random.normal(kx, (B, C, Himg, Wimg), dtype=jnp.float32)
    # Deterministic parameter init (synthetic; no checkpoint loading).
    w1 = jax.random.normal(kw1, (D, HIDDEN), dtype=jnp.float32) * 0.02
    b1 = jnp.zeros((1, HIDDEN), dtype=jnp.float32)
    w2 = jax.random.normal(kw2, (HIDDEN, D), dtype=jnp.float32) * 0.02
    b2 = jnp.zeros((1, D), dtype=jnp.float32)

    out = torch_model_forward(x, w1, b1, w2, b2)
    out = jax.block_until_ready(out)

    # Reference in plain JAX with matching bf16 operands / f32 accumulation.
    xf = x.reshape(B, D).astype(jnp.bfloat16)
    w1b, w2b = w1.astype(jnp.bfloat16), w2.astype(jnp.bfloat16)
    h_ref = jnp.maximum(
        jnp.dot(xf, w1b, preferred_element_type=jnp.float32) + b1, 0.0)
    ref = jnp.dot(h_ref.astype(jnp.bfloat16), w2b,
                  preferred_element_type=jnp.float32) + b2
    ref = ref.reshape(B, C, Himg, Wimg)

    assert out.shape == (B, C, Himg, Wimg)
    assert out.dtype == jnp.float32
    assert jnp.allclose(out, ref, atol=1e-2, rtol=1e-2), float(
        jnp.max(jnp.abs(out - ref)))

    print("KERNEL_OK")
</pallas_src>

<mosaic_0001>
module attributes {stable_mosaic.version = 11 : i64} {
  func.func @autoencoder_kernel(%arg0: i32, %arg1: memref<8x1024xbf16, #tpu.memory_space<vmem>>, %arg2: memref<1024x128xbf16, #tpu.memory_space<vmem>>, %arg3: memref<1x128xf32, #tpu.memory_space<vmem>>, %arg4: memref<128x1024xbf16, #tpu.memory_space<vmem>>, %arg5: memref<1x1024xf32, #tpu.memory_space<vmem>>, %arg6: memref<8x1024xf32, #tpu.memory_space<vmem>>) attributes {dimension_semantics = [#tpu.dimension_semantics<parallel>], iteration_bounds = array<i64: 1>, scalar_prefetch = 0 : i64, scratch_operands = 0 : i64, tpu.core_type = #tpu.core_type<tc>, window_params = [{transform_indices = @transform_0, window_bounds = array<i64: 8, 1024>}, {pipeline_mode = #tpu.pipeline_mode<synchronous>, transform_indices = @transform_1, window_bounds = array<i64: 1024, 128>}, {pipeline_mode = #tpu.pipeline_mode<synchronous>, transform_indices = @transform_2, window_bounds = array<i64: 1, 128>}, {pipeline_mode = #tpu.pipeline_mode<synchronous>, transform_indices = @transform_3, window_bounds = array<i64: 128, 1024>}, {pipeline_mode = #tpu.pipeline_mode<synchronous>, transform_indices = @transform_4, window_bounds = array<i64: 1, 1024>}, {transform_indices = @transform_5, window_bounds = array<i64: 8, 1024>}]} {
    %c0 = arith.constant 0 : index
    %c0_0 = arith.constant 0 : index
    %0 = vector.load %arg1[%c0, %c0_0] : memref<8x1024xbf16, #tpu.memory_space<vmem>>, vector<8x1024xbf16>
    %c0_1 = arith.constant 0 : index
    %c0_2 = arith.constant 0 : index
    %1 = vector.load %arg2[%c0_1, %c0_2] : memref<1024x128xbf16, #tpu.memory_space<vmem>>, vector<1024x128xbf16>
    %cst = arith.constant dense<0.000000e+00> : vector<8x128xf32>
    %2 = tpu.matmul %0, %1, %cst {dimension_numbers = #tpu.dot_dimension_numbers<[1], [0], [0], [1], [0, 0, 1, 1], [], []>} : vector<8x1024xbf16>, vector<1024x128xbf16>, vector<8x128xf32> -> vector<8x128xf32>
    %c0_3 = arith.constant 0 : index
    %c0_4 = arith.constant 0 : index
    %3 = vector.load %arg3[%c0_3, %c0_4] : memref<1x128xf32, #tpu.memory_space<vmem>>, vector<1x128xf32>
    %4 = vector.broadcast %3 : vector<1x128xf32> to vector<8x128xf32>
    %5 = arith.addf %2, %4 : vector<8x128xf32>
    %cst_5 = arith.constant 0.000000e+00 : f32
    %6 = vector.broadcast %cst_5 : f32 to vector<8x128xf32>
    %7 = arith.maximumf %5, %6 : vector<8x128xf32>
    %8 = arith.truncf %7 : vector<8x128xf32> to vector<8x128xbf16>
    %c0_6 = arith.constant 0 : index
    %c0_7 = arith.constant 0 : index
    %9 = vector.load %arg4[%c0_6, %c0_7] : memref<128x1024xbf16, #tpu.memory_space<vmem>>, vector<128x1024xbf16>
    %cst_8 = arith.constant dense<0.000000e+00> : vector<8x1024xf32>
    %10 = tpu.matmul %8, %9, %cst_8 {dimension_numbers = #tpu.dot_dimension_numbers<[1], [0], [0], [1], [0, 0, 1, 1], [], []>} : vector<8x128xbf16>, vector<128x1024xbf16>, vector<8x1024xf32> -> vector<8x1024xf32>
    %c0_9 = arith.constant 0 : index
    %c0_10 = arith.constant 0 : index
    %11 = vector.load %arg5[%c0_9, %c0_10] : memref<1x1024xf32, #tpu.memory_space<vmem>>, vector<1x1024xf32>
    %12 = vector.broadcast %11 : vector<1x1024xf32> to vector<8x1024xf32>
    %13 = arith.addf %10, %12 : vector<8x1024xf32>
    %c0_11 = arith.constant 0 : index
    %c0_12 = arith.constant 0 : index
    %14 = vector.load %arg6[%c0_11, %c0_12] : memref<8x1024xf32, #tpu.memory_space<vmem>>, vector<8x1024xf32>
    tpu.vector_store %arg6[%c0_11, %c0_12], %13 {strides = array<i32>} : memref<8x1024xf32, #tpu.memory_space<vmem>>, vector<8x1024xf32>,
    return
  }
  func.func @transform_0(%arg0: i32) -> (i32, i32) {
    %c0_i32 = arith.constant 0 : i32
    %c0_i32_0 = arith.constant 0 : i32
    return %arg0, %c0_i32 : i32, i32
  }
  func.func @transform_1(%arg0: i32) -> (i32, i32) {
    %c0_i32 = arith.constant 0 : i32
    %c0_i32_0 = arith.constant 0 : i32
    %c0_i32_1 = arith.constant 0 : i32
    return %c0_i32, %c0_i32_0 : i32, i32
  }
  func.func @transform_2(%arg0: i32) -> (i32, i32) {
    %c0_i32 = arith.constant 0 : i32
    %c0_i32_0 = arith.constant 0 : i32
    %c0_i32_1 = arith.constant 0 : i32
    return %c0_i32, %c0_i32_0 : i32, i32
  }
  func.func @transform_3(%arg0: i32) -> (i32, i32) {
    %c0_i32 = arith.constant 0 : i32
    %c0_i32_0 = arith.constant 0 : i32
    %c0_i32_1 = arith.constant 0 : i32
    return %c0_i32, %c0_i32_0 : i32, i32
  }
  func.func @transform_4(%arg0: i32) -> (i32, i32) {
    %c0_i32 = arith.constant 0 : i32
    %c0_i32_0 = arith.constant 0 : i32
    %c0_i32_1 = arith.constant 0 : i32
    return %c0_i32, %c0_i32_0 : i32, i32
  }
  func.func @transform_5(%arg0: i32) -> (i32, i32) {
    %c0_i32 = arith.constant 0 : i32
    %c0_i32_0 = arith.constant 0 : i32
    return %arg0, %c0_i32 : i32, i32
  }
}

module attributes {stable_mosaic.version = 11 : i64} {
  func.func @autoencoder_kernel(%arg0: i32, %arg1: memref<8x1024xbf16, #tpu.memory_space<vmem>>, %arg2: memref<1024x128xbf16, #tpu.memory_space<vmem>>, %arg3: memref<1x128xf32, #tpu.memory_space<vmem>>, %arg4: memref<128x1024xbf16, #tpu.memory_space<vmem>>, %arg5: memref<1x1024xf32, #tpu.memory_space<vmem>>, %arg6: memref<8x1024xf32, #tpu.memory_space<vmem>>) attributes {dimension_semantics = [#tpu.dimension_semantics<parallel>], iteration_bounds = array<i64: 1>, scalar_prefetch = 0 : i64, scratch_operands = 0 : i64, tpu.core_type = #tpu.core_type<tc>, window_params = [{transform_indices = @transform_0, window_bounds = array<i64: 8, 1024>}, {pipeline_mode = #tpu.pipeline_mode<synchronous>, transform_indices = @transform_1, window_bounds = array<i64: 1024, 128>}, {pipeline_mode = #tpu.pipeline_mode<synchronous>, transform_indices = @transform_2, window_bounds = array<i64: 1, 128>}, {pipeline_mode = #tpu.pipeline_mode<synchronous>, transform_indices = @transform_3, window_bounds = array<i64: 128, 1024>}, {pipeline_mode = #tpu.pipeline_mode<synchronous>, transform_indices = @transform_4, window_bounds = array<i64: 1, 1024>}, {transform_indices = @transform_5, window_bounds = array<i64: 8, 1024>}]} {
    %c0 = arith.constant 0 : index
    %c0_0 = arith.constant 0 : index
    %0 = vector.load %arg1[%c0, %c0_0] : memref<8x1024xbf16, #tpu.memory_space<vmem>>, vector<8x1024xbf16>
    %c0_1 = arith.constant 0 : index
    %c0_2 = arith.constant 0 : index
    %1 = vector.load %arg2[%c0_1, %c0_2] : memref<1024x128xbf16, #tpu.memory_space<vmem>>, vector<1024x128xbf16>
    %cst = arith.constant dense<0.000000e+00> : vector<8x128xf32>
    %2 = tpu.matmul %0, %1, %cst {dimension_numbers = #tpu.dot_dimension_numbers<[1], [0], [0], [1], [0, 0, 1, 1], [], []>} : vector<8x1024xbf16>, vector<1024x128xbf16>, vector<8x128xf32> -> vector<8x128xf32>
    %c0_3 = arith.constant 0 : index
    %c0_4 = arith.constant 0 : index
    %3 = vector.load %arg3[%c0_3, %c0_4] : memref<1x128xf32, #tpu.memory_space<vmem>>, vector<1x128xf32>
    %4 = vector.broadcast %3 : vector<1x128xf32> to vector<8x128xf32>
    %5 = arith.addf %2, %4 : vector<8x128xf32>
    %cst_5 = arith.constant 0.000000e+00 : f32
    %6 = vector.broadcast %cst_5 : f32 to vector<8x128xf32>
    %7 = arith.maximumf %5, %6 : vector<8x128xf32>
    %8 = arith.truncf %7 : vector<8x128xf32> to vector<8x128xbf16>
    %c0_6 = arith.constant 0 : index
    %c0_7 = arith.constant 0 : index
    %9 = vector.load %arg4[%c0_6, %c0_7] : memref<128x1024xbf16, #tpu.memory_space<vmem>>, vector<128x1024xbf16>
    %cst_8 = arith.constant dense<0.000000e+00> : vector<8x1024xf32>
    %10 = tpu.matmul %8, %9, %cst_8 {dimension_numbers = #tpu.dot_dimension_numbers<[1], [0], [0], [1], [0, 0, 1, 1], [], []>} : vector<8x128xbf16>, vector<128x1024xbf16>, vector<8x1024xf32> -> vector<8x1024xf32>
    %c0_9 = arith.constant 0 : index
    %c0_10 = arith.constant 0 : index
    %11 = vector.load %arg5[%c0_9, %c0_10] : memref<1x1024xf32, #tpu.memory_space<vmem>>, vector<1x1024xf32>
    %12 = vector.broadcast %11 : vector<1x1024xf32> to vector<8x1024xf32>
    %13 = arith.addf %10, %12 : vector<8x1024xf32>
    %c0_11 = arith.constant 0 : index
    %c0_12 = arith.constant 0 : index
    %14 = vector.load %arg6[%c0_11, %c0_12] : memref<8x1024xf32, #tpu.memory_space<vmem>>, vector<8x1024xf32>
    tpu.vector_store %arg6[%c0_11, %c0_12], %13 {strides = array<i32>} : memref<8x1024xf32, #tpu.memory_space<vmem>>, vector<8x1024xf32>,
    return
  }
  func.func @transform_0(%arg0: i32) -> (i32, i32) {
    %c0_i32 = arith.constant 0 : i32
    %c0_i32_0 = arith.constant 0 : i32
    return %arg0, %c0_i32 : i32, i32
  }
  func.func @transform_1(%arg0: i32) -> (i32, i32) {
    %c0_i32 = arith.constant 0 : i32
    %c0_i32_0 = arith.constant 0 : i32
    %c0_i32_1 = arith.constant 0 : i32
    return %c0_i32, %c0_i32_0 : i32, i32
  }
  func.func @transform_2(%arg0: i32) -> (i32, i32) {
    %c0_i32 = arith.constant 0 : i32
    %c0_i32_0 = arith.constant 0 : i32
    %c0_i32_1 = arith.constant 0 : i32
    return %c0_i32, %c0_i32_0 : i32, i32
  }
  func.func @transform_3(%arg0: i32) -> (i32, i32) {
    %c0_i32 = arith.constant 0 : i32
    %c0_i32_0 = arith.constant 0 : i32
    %c0_i32_1 = arith.constant 0 : i32
    return %c0_i32, %c0_i32_0 : i32, i32
  }
  func.func @transform_4(%arg0: i32) -> (i32, i32) {
    %c0_i32 = arith.constant 0 : i32
    %c0_i32_0 = arith.constant 0 : i32
    %c0_i32_1 = arith.constant 0 : i32
    return %c0_i32, %c0_i32_0 : i32, i32
  }
  func.func @transform_5(%arg0: i32) -> (i32, i32) {
    %c0_i32 = arith.constant 0 : i32
    %c0_i32_0 = arith.constant 0 : i32
    return %arg0, %c0_i32 : i32, i32
  }
}

</mosaic_0001>

<llo_original>
// kernel: tpu_custom_call.1
$region0: #{tpu_custom_call.1}
  #allocation0 [shape = 'u32[]', space=smem, size = 0x4, offset = 0x4, fixed_abs, tag = 'smem constant byte address 0x4 - core index']
  #allocation1 [shape = 'u32[144,128]{1,0:T(1,128)}', space=vmem, size = 0x12000, scoped, tag = 'internal scratch']
  %s0 = inlined_call_operand.hbm [shape: bf16[8,1024], index: 0, kind: input, shape index: {}]
  %s1 = inlined_call_operand.hbm [shape: bf16[1024,128], index: 1, kind: input, shape index: {}]
  %s2 = inlined_call_operand.vmem [shape: f32[1,128], index: 2, kind: input, shape index: {}]
  %s3 = inlined_call_operand.hbm [shape: bf16[128,1024], index: 3, kind: input, shape index: {}]
  %s4 = inlined_call_operand.hbm [shape: f32[1,1024], index: 4, kind: input, shape index: {}]
  %s5 = inlined_call_operand.hbm [shape: f32[8,1024], index: 5, kind: output, shape index: {}]
  %s6 = sld [smem:[#allocation0]]
  $region46: #{tpu_custom_call.1} parent=0
    _
  %s8 = ssub.s32 1, %s6
  %s9 = scalar_select 0, %s8, %s6
  $region1: #{tpu_custom_call.1} parent=0
    #allocation2 [shape = 'u8[16384]{0}', space=vmem, size = 0x4000, scoped, tag = 'input window, operand 0, single buffered']
    #allocation3 [shape = 's32[1]{0}', space=sflag, size = 0x4, scoped, tag = 'scoped memory for tpu_custom_call.1']
    #allocation4 [shape = 's32[1]{0}', space=sflag, size = 0x4, scoped, tag = 'scoped memory for tpu_custom_call.1']
    #allocation5 [shape = 'u8[262144]{0}', space=vmem, size = 0x40000, scoped, tag = 'input window, operand 1, single buffered']
    #allocation6 [shape = 's32[1]{0}', space=sflag, size = 0x4, scoped, tag = 'scoped memory for tpu_custom_call.1']
    #allocation7 [shape = 'u8[262144]{0}', space=vmem, size = 0x40000, scoped, tag = 'input window, operand 3, single buffered']
    #allocation8 [shape = 'u8[4096]{0}', space=vmem, size = 0x1000, scoped, tag = 'input window, operand 4, single buffered']
    #allocation9 [shape = 's32[1]{0}', space=sflag, size = 0x4, scoped, tag = 'scoped memory for tpu_custom_call.1']
    #allocation10 [shape = 'u8[32768]{0}', space=vmem, size = 0x8000, scoped, tag = 'output window, operand 0, single buffered']
    %10 = vsyncpa [#allocation3], 0
    %11 = vsyncpa [#allocation6], 0
    %12 = vsyncpa [#allocation9], 0
    %13 = vsyncpa [#allocation4], 0
    // Predicated region
    $region2: #{tpu_custom_call.1} parent=1 // pred_check
      _
    $region3: #{tpu_custom_call.1} parent=1 // pred_check_branch
      %15 = sbr.rel (0) target = $region5
    $region4: #{tpu_custom_call.1} parent=1 // pred_region
      %s17 = ssub.s32 512, 512
      %18 = vsyncadd [#allocation3], %s17
      %s20 = sshll.u32 [#allocation2], 4
      %s21 = int_to_ptr.vmem [resolvable:$true] %s20
      %23 = dma.hbm_to_vmem [thread:$0]  %s0, 512, %s21, [#allocation3]
    $region5: #{tpu_custom_call.1} parent=1 // pred_fallthru
      _
    // Predicated region
    $region6: #{tpu_custom_call.1} parent=1 // pred_check
      _
    $region7: #{tpu_custom_call.1} parent=1 // pred_check_branch
      %25 = sbr.rel (0) target = $region9
    $region8: #{tpu_custom_call.1} parent=1 // pred_region
      %s27 = ssub.s32 8192, 8192
      %28 = vsyncadd [#allocation6], %s27
      %s29 = sshll.u32 [#allocation5], 4
      %s30 = int_to_ptr.vmem [resolvable:$true] %s29
      %35 = dma.hbm_to_vmem [thread:$0]  %s1, 8192, %s30, [#allocation6], 64, 64, 4
    $region9: #{tpu_custom_call.1} parent=1 // pred_fallthru
      _
    // Predicated region
    $region10: #{tpu_custom_call.1} parent=1 // pred_check
      _
    $region11: #{tpu_custom_call.1} parent=1 // pred_check_branch
      %37 = sbr.rel (0) target = $region13
    $region12: #{tpu_custom_call.1} parent=1 // pred_region
      _
    $region13: #{tpu_custom_call.1} parent=1 // pred_fallthru
      _
    // Predicated region
    $region14: #{tpu_custom_call.1} parent=1 // pred_check
      _
    $region15: #{tpu_custom_call.1} parent=1 // pred_check_branch
      %39 = sbr.rel (0) target = $region17
    $region16: #{tpu_custom_call.1} parent=1 // pred_region
      %s41 = ssub.s32 8192, 8192
      %42 = vsyncadd [#allocation6], %s41
      %s43 = sshll.u32 [#allocation7], 4
      %s44 = int_to_ptr.vmem [resolvable:$true] %s43
      %49 = dma.hbm_to_vmem [thread:$0]  %s3, 8192, %s44, [#allocation6], 512, 512, 32
    $region17: #{tpu_custom_call.1} parent=1 // pred_fallthru
      _
    // Predicated region
    $region18: #{tpu_custom_call.1} parent=1 // pred_check
      _
    $region19: #{tpu_custom_call.1} parent=1 // pred_check_branch
      %51 = sbr.rel (0) target = $region21
    $region20: #{tpu_custom_call.1} parent=1 // pred_region
      %s53 = ssub.s32 128, 128
      %54 = vsyncadd [#allocation9], %s53
      %s56 = sshll.u32 [#allocation8], 4
      %s57 = int_to_ptr.vmem [resolvable:$true] %s56
      %59 = dma.hbm_to_vmem [thread:$0]  %s4, 128, %s57, [#allocation9]
    $region21: #{tpu_custom_call.1} parent=1 // pred_fallthru
      _
    // Predicated region
    $region22: #{tpu_custom_call.1} parent=1 // pred_check
      _
    $region23: #{tpu_custom_call.1} parent=1 // pred_check_branch
      %61 = sbr.rel (0) target = $region25
    $region24: #{tpu_custom_call.1} parent=1 // pred_region
      %62 = dma.done [#allocation3], 512
    $region25: #{tpu_custom_call.1} parent=1 // pred_fallthru
      _
    // Predicated region
    $region26: #{tpu_custom_call.1} parent=1 // pred_check
      _
    $region27: #{tpu_custom_call.1} parent=1 // pred_check_branch
      %64 = sbr.rel (0) target = $region29
    $region28: #{tpu_custom_call.1} parent=1 // pred_region
      %65 = dma.done [#allocation6], 8192
    $region29: #{tpu_custom_call.1} parent=1 // pred_fallthru
      _
    // Predicated region
    $region30: #{tpu_custom_call.1} parent=1 // pred_check
      _
    $region31: #{tpu_custom_call.1} parent=1 // pred_check_branch
      %67 = sbr.rel (0) target = $region33
    $region32: #{tpu_custom_call.1} parent=1 // pred_region
      %68 = dma.done [#allocation6], 8192
    $region33: #{tpu_custom_call.1} parent=1 // pred_fallthru
      _
    // Predicated region
    $region34: #{tpu_custom_call.1} parent=1 // pred_check
      _
    $region35: #{tpu_custom_call.1} parent=1 // pred_check_branch
      %70 = sbr.rel (0) target = $region37
    $region36: #{tpu_custom_call.1} parent=1 // pred_region
      %71 = dma.done [#allocation9], 128
    $region37: #{tpu_custom_call.1} parent=1 // pred_fallthru
      _
    %v73 = vld [vmem:[#allocation2] sm:$0xff]
    %v74 = vld [vmem:[#allocation2 + $0x8] sm:$0xff]
    %v75 = vld [vmem:[#allocation2 + $0x10] sm:$0xff]
    %v76 = vld [vmem:[#allocation2 + $0x18] sm:$0xff]
    %v77 = vld [vmem:[#allocation5] sm:$0xf]
    %v78 = vld [vmem:[#allocation5 + $0x4] sm:$0xf]
    %v79 = vld [vmem:[#allocation5 + $0x8] sm:$0xf]
    %v80 = vld [vmem:[#allocation5 + $0xc] sm:$0xf]
    %v81 = vld [vmem:[#allocation5 + $0x10] sm:$0xf]
    %v82 = vld [vmem:[#allocation5 + $0x14] sm:$0xf]
    %v83 = vld [vmem:[#allocation5 + $0x18] sm:$0xf]
    %v84 = vld [vmem:[#allocation5 + $0x1c] sm:$0xf]
    %v85 = vld [vmem:[#allocation5 + $0x20] sm:$0xf]
    %v86 = vld [vmem:[#allocation5 + $0x24] sm:$0xf]
    %v87 = vld [vmem:[#allocation5 + $0x28] sm:$0xf]
    %v88 = vld [vmem:[#allocation5 + $0x2c] sm:$0xf]
    %v89 = vld [vmem:[#allocation5 + $0x30] sm:$0xf]
    %v90 = vld [vmem:[#allocation5 + $0x34] sm:$0xf]
    %v91 = vld [vmem:[#allocation5 + $0x38] sm:$0xf]
    %v92 = vld [vmem:[#allocation5 + $0x3c] sm:$0xf]
    %v93 = vld [vmem:[#allocation5 + $0x40] sm:$0xf]
    %v94 = vld [vmem:[#allocation5 + $0x44] sm:$0xf]
    %v95 = vld [vmem:[#allocation5 + $0x48] sm:$0xf]
    %v96 = vld [vmem:[#allocation5 + $0x4c] sm:$0xf]
    %v97 = vld [vmem:[#allocation5 + $0x50] sm:$0xf]
    %v98 = vld [vmem:[#allocation5 + $0x54] sm:$0xf]
    %v99 = vld [vmem:[#allocation5 + $0x58] sm:$0xf]
    %v100 = vld [vmem:[#allocation5 + $0x5c] sm:$0xf]
    %v101 = vld [vmem:[#allocation5 + $0x60] sm:$0xf]
    %v102 = vld [vmem:[#allocation5 + $0x64] sm:$0xf]
    %v103 = vld [vmem:[#allocation5 + $0x68] sm:$0xf]
    %v104 = vld [vmem:[#allocation5 + $0x6c] sm:$0xf]
    %v105 = vld [vmem:[#allocation5 + $0x70] sm:$0xf]
    %v106 = vld [vmem:[#allocation5 + $0x74] sm:$0xf]
    %v107 = vld [vmem:[#allocation5 + $0x78] sm:$0xf]
    %v108 = vld [vmem:[#allocation5 + $0x7c] sm:$0xf]
    %v109 = vld [vmem:[#allocation5 + $0x80] sm:$0xf]
    %v110 = vld [vmem:[#allocation5 + $0x84] sm:$0xf]
    %v111 = vld [vmem:[#allocation5 + $0x88] sm:$0xf]
    %v112 = vld [vmem:[#allocation5 + $0x8c] sm:$0xf]
    %v113 = vld [vmem:[#allocation5 + $0x90] sm:$0xf]
    %v114 = vld [vmem:[#allocation5 + $0x94] sm:$0xf]
    %v115 = vld [vmem:[#allocation5 + $0x98] sm:$0xf]
    %v116 = vld [vmem:[#allocation5 + $0x9c] sm:$0xf]
    %v117 = vld [vmem:[#allocation5 + $0xa0] sm:$0xf]
    %v118 = vld [vmem:[#allocation5 + $0xa4] sm:$0xf]
    %v119 = vld [vmem:[#allocation5 + $0xa8] sm:$0xf]
    %v120 = vld [vmem:[#allocation5 + $0xac] sm:$0xf]
    %v121 = vld [vmem:[#allocation5 + $0xb0] sm:$0xf]
    %v122 = vld [vmem:[#allocation5 + $0xb4] sm:$0xf]
    %v123 = vld [vmem:[#allocation5 + $0xb8] sm:$0xf]
    %v124 = vld [vmem:[#allocation5 + $0xbc] sm:$0xf]
    %v125 = vld [vmem:[#allocation5 + $0xc0] sm:$0xf]
    %v126 = vld [vmem:[#allocation5 + $0xc4] sm:$0xf]
    %v127 = vld [vmem:[#allocation5 + $0xc8] sm:$0xf]
    %v128 = vld [vmem:[#allocation5 + $0xcc] sm:$0xf]
    %v129 = vld [vmem:[#allocation5 + $0xd0] sm:$0xf]
    %v130 = vld [vmem:[#allocation5 + $0xd4] sm:$0xf]
    %v131 = vld [vmem:[#allocation5 + $0xd8] sm:$0xf]
    %v132 = vld [vmem:[#allocation5 + $0xdc] sm:$0xf]
    %v133 = vld [vmem:[#allocation5 + $0xe0] sm:$0xf]
    %v134 = vld [vmem:[#allocation5 + $0xe4] sm:$0xf]
    %v135 = vld [vmem:[#allocation5 + $0xe8] sm:$0xf]
    %v136 = vld [vmem:[#allocation5 + $0xec] sm:$0xf]
    %v137 = vld [vmem:[#allocation5 + $0xf0] sm:$0xf]
    %v138 = vld [vmem:[#allocation5 + $0xf4] sm:$0xf]
    %v139 = vld [vmem:[#allocation5 + $0xf8] sm:$0xf]
    %v140 = vld [vmem:[#allocation5 + $0xfc] sm:$0xf]
    %v141 = vld [vmem:[#allocation5 + $0x100] sm:$0xf]
    %v142 = vld [vmem:[#allocation5 + $0x104] sm:$0xf]
    %v143 = vld [vmem:[#allocation5 + $0x108] sm:$0xf]
    %v144 = vld [vmem:[#allocation5 + $0x10c] sm:$0xf]
    %v145 = vld [vmem:[#allocation5 + $0x110] sm:$0xf]
    %v146 = vld [vmem:[#allocation5 + $0x114] sm:$0xf]
    %v147 = vld [vmem:[#allocation5 + $0x118] sm:$0xf]
    %v148 = vld [vmem:[#allocation5 + $0x11c] sm:$0xf]
    %v149 = vld [vmem:[#allocation5 + $0x120] sm:$0xf]
    %v150 = vld [vmem:[#allocation5 + $0x124] sm:$0xf]
    %v151 = vld [vmem:[#allocation5 + $0x128] sm:$0xf]
    %v152 = vld [vmem:[#allocation5 + $0x12c] sm:$0xf]
    %v153 = vld [vmem:[#allocation5 + $0x130] sm:$0xf]
    %v154 = vld [vmem:[#allocation5 + $0x134] sm:$0xf]
    %v155 = vld [vmem:[#allocation5 + $0x138] sm:$0xf]
    %v156 = vld [vmem:[#allocation5 + $0x13c] sm:$0xf]
    %v157 = vld [vmem:[#allocation5 + $0x140] sm:$0xf]
    %v158 = vld [vmem:[#allocation5 + $0x144] sm:$0xf]
    %v159 = vld [vmem:[#allocation5 + $0x148] sm:$0xf]
    %v160 = vld [vmem:[#allocation5 + $0x14c] sm:$0xf]
    %v161 = vld [vmem:[#allocation5 + $0x150] sm:$0xf]
    %v162 = vld [vmem:[#allocation5 + $0x154] sm:$0xf]
    %v163 = vld [vmem:[#allocation5 + $0x158] sm:$0xf]
    %v164 = vld [vmem:[#allocation5 + $0x15c] sm:$0xf]
    %v165 = vld [vmem:[#allocation5 + $0x160] sm:$0xf]
    %v166 = vld [vmem:[#allocation5 + $0x164] sm:$0xf]
    %v167 = vld [vmem:[#allocation5 + $0x168] sm:$0xf]
    %v168 = vld [vmem:[#allocation5 + $0x16c] sm:$0xf]
    %v169 = vld [vmem:[#allocation5 + $0x170] sm:$0xf]
    %v170 = vld [vmem:[#allocation5 + $0x174] sm:$0xf]
    %v171 = vld [vmem:[#allocation5 + $0x178] sm:$0xf]
    %v172 = vld [vmem:[#allocation5 + $0x17c] sm:$0xf]
    %v173 = vld [vmem:[#allocation5 + $0x180] sm:$0xf]
    %v174 = vld [vmem:[#allocation5 + $0x184] sm:$0xf]
    %v175 = vld [vmem:[#allocation5 + $0x188] sm:$0xf]
    %v176 = vld [vmem:[#allocation5 + $0x18c] sm:$0xf]
    %v177 = vld [vmem:[#allocation5 + $0x190] sm:$0xf]
    %v178 = vld [vmem:[#allocation5 + $0x194] sm:$0xf]
    %v179 = vld [vmem:[#allocation5 + $0x198] sm:$0xf]
    %v180 = vld [vmem:[#allocation5 + $0x19c] sm:$0xf]
    %v181 = vld [vmem:[#allocation5 + $0x1a0] sm:$0xf]
    %v182 = vld [vmem:[#allocation5 + $0x1a4] sm:$0xf]
    %v183 = vld [vmem:[#allocation5 + $0x1a8] sm:$0xf]
    %v184 = vld [vmem:[#allocation5 + $0x1ac] sm:$0xf]
    %v185 = vld [vmem:[#allocation5 + $0x1b0] sm:$0xf]
    %v186 = vld [vmem:[#allocation5 + $0x1b4] sm:$0xf]
    %v187 = vld [vmem:[#allocation5 + $0x1b8] sm:$0xf]
    %v188 = vld [vmem:[#allocation5 + $0x1bc] sm:$0xf]
    %v189 = vld [vmem:[#allocation5 + $0x1c0] sm:$0xf]
    %v190 = vld [vmem:[#allocation5 + $0x1c4] sm:$0xf]
    %v191 = vld [vmem:[#allocation5 + $0x1c8] sm:$0xf]
    %v192 = vld [vmem:[#allocation5 + $0x1cc] sm:$0xf]
    %v193 = vld [vmem:[#allocation5 + $0x1d0] sm:$0xf]
    %v194 = vld [vmem:[#allocation5 + $0x1d4] sm:$0xf]
    %v195 = vld [vmem:[#allocation5 + $0x1d8] sm:$0xf]
    %v196 = vld [vmem:[#allocation5 + $0x1dc] sm:$0xf]
    %v197 = vld [vmem:[#allocation5 + $0x1e0] sm:$0xf]
    %v198 = vld [vmem:[#allocation5 + $0x1e4] sm:$0xf]
    %v199 = vld [vmem:[#allocation5 + $0x1e8] sm:$0xf]
    %v200 = vld [vmem:[#allocation5 + $0x1ec] sm:$0xf]
    %v201 = vld [vmem:[#allocation5 + $0x1f0] sm:$0xf]
    %v202 = vld [vmem:[#allocation5 + $0x1f4] sm:$0xf]
    %v203 = vld [vmem:[#allocation5 + $0x1f8] sm:$0xf]
    %v204 = vld [vmem:[#allocation5 + $0x1fc] sm:$0xf]
    %v205 = vld [vmem:[%s2] sm:$0x1]
    %v207 = vlaneseq
    %v208 = vshrl.u32 %v207, 7
    %v209 = vsub.s32 0, %v208
    %v210 = vrot.slane %v205, %v209
    %v216 = vunpack.c.l.b16 %v73
    %v217 = vunpack.c.h.b16 %v73
    %v218 = vunpack.c.l.b16 %v74
    %v219 = vunpack.c.h.b16 %v74
    %v220 = vunpack.c.l.b16 %v75
    %v221 = vunpack.c.h.b16 %v75
    %v222 = vunpack.c.l.b16 %v76
    %v223 = vunpack.c.h.b16 %v76
    %v224 = vpack.c.b16 %v216, %v216
    %v225 = vpack.c.b16 %v217, %v217
    %v226 = vpack.c.b16 %v218, %v218
    %v227 = vpack.c.b16 %v219, %v219
    %v228 = vpack.c.b16 %v220, %v220
    %v229 = vpack.c.b16 %v221, %v221
    %v230 = vpack.c.b16 %v222, %v222
    %v231 = vpack.c.b16 %v223, %v223
    %v368 = vunpack.c.l.b16 %v77
    %v369 = vunpack.c.l.b16 %v78
    %v370 = vunpack.c.l.b16 %v79
    %v371 = vunpack.c.l.b16 %v80
    %v372 = vunpack.c.l.b16 %v81
    %v373 = vunpack.c.l.b16 %v82
    %v374 = vunpack.c.l.b16 %v83
    %v375 = vunpack.c.l.b16 %v84
    %v376 = vunpack.c.l.b16 %v85
    %v377 = vunpack.c.l.b16 %v86
    %v378 = vunpack.c.l.b16 %v87
    %v379 = vunpack.c.l.b16 %v88
    %v380 = vunpack.c.l.b16 %v89
    %v381 = vunpack.c.l.b16 %v90
    %v382 = vunpack.c.l.b16 %v91
    %v383 = vunpack.c.l.b16 %v92
    %v384 = vunpack.c.l.b16 %v93
    %v385 = vunpack.c.l.b16 %v94
    %v386 = vunpack.c.l.b16 %v95
    %v387 = vunpack.c.l.b16 %v96
    %v388 = vunpack.c.l.b16 %v97
    %v389 = vunpack.c.l.b16 %v98
    %v390 = vunpack.c.l.b16 %v99
    %v391 = vunpack.c.l.b16 %v100
    %v392 = vunpack.c.l.b16 %v101
    %v393 = vunpack.c.l.b16 %v102
    %v394 = vunpack.c.l.b16 %v103
    %v395 = vunpack.c.l.b16 %v104
    %v396 = vunpack.c.l.b16 %v105
    %v397 = vunpack.c.l.b16 %v106
    %v398 = vunpack.c.l.b16 %v107
    %v399 = vunpack.c.l.b16 %v108
    %v400 = vunpack.c.l.b16 %v109
    %v401 = vunpack.c.l.b16 %v110
    %v402 = vunpack.c.l.b16 %v111
    %v403 = vunpack.c.l.b16 %v112
    %v404 = vunpack.c.l.b16 %v113
    %v405 = vunpack.c.l.b16 %v114
    %v406 = vunpack.c.l.b16 %v115
    %v407 = vunpack.c.l.b16 %v116
    %v408 = vunpack.c.l.b16 %v117
    %v409 = vunpack.c.l.b16 %v118
    %v410 = vunpack.c.l.b16 %v119
    %v411 = vunpack.c.l.b16 %v120
    %v412 = vunpack.c.l.b16 %v121
    %v413 = vunpack.c.l.b16 %v122
    %v414 = vunpack.c.l.b16 %v123
    %v415 = vunpack.c.l.b16 %v124
    %v416 = vunpack.c.l.b16 %v125
    %v417 = vunpack.c.l.b16 %v126
    %v418 = vunpack.c.l.b16 %v127
    %v419 = vunpack.c.l.b16 %v128
    %v420 = vunpack.c.l.b16 %v129
    %v421 = vunpack.c.l.b16 %v130
    %v422 = vunpack.c.l.b16 %v131
    %v423 = vunpack.c.l.b16 %v132
    %v424 = vunpack.c.l.b16 %v133
    %v425 = vunpack.c.l.b16 %v134
    %v426 = vunpack.c.l.b16 %v135
    %v427 = vunpack.c.l.b16 %v136
    %v428 = vunpack.c.l.b16 %v137
    %v429 = vunpack.c.l.b16 %v138
    %v430 = vunpack.c.l.b16 %v139
    %v431 = vunpack.c.l.b16 %v140
    %v432 = vunpack.c.l.b16 %v141
    %v433 = vunpack.c.l.b16 %v142
    %v434 = vunpack.c.l.b16 %v143
    %v435 = vunpack.c.l.b16 %v144
    %v436 = vunpack.c.l.b16 %v145
    %v437 = vunpack.c.l.b16 %v146
    %v438 = vunpack.c.l.b16 %v147
    %v439 = vunpack.c.l.b16 %v148
    %v440 = vunpack.c.l.b16 %v149
    %v441 = vunpack.c.l.b16 %v150
    %v442 = vunpack.c.l.b16 %v151
    %v443 = vunpack.c.l.b16 %v152
    %v444 = vunpack.c.l.b16 %v153
    %v445 = vunpack.c.l.b16 %v154
    %v446 = vunpack.c.l.b16 %v155
    %v447 = vunpack.c.l.b16 %v156
    %v448 = vunpack.c.l.b16 %v157
    %v449 = vunpack.c.l.b16 %v158
    %v450 = vunpack.c.l.b16 %v159
    %v451 = vunpack.c.l.b16 %v160
    %v452 = vunpack.c.l.b16 %v161
    %v453 = vunpack.c.l.b16 %v162
    %v454 = vunpack.c.l.b16 %v163
    %v455 = vunpack.c.l.b16 %v164
    %v456 = vunpack.c.l.b16 %v165
    %v457 = vunpack.c.l.b16 %v166
    %v458 = vunpack.c.l.b16 %v167
    %v459 = vunpack.c.l.b16 %v168
    %v460 = vunpack.c.l.b16 %v169
    %v461 = vunpack.c.l.b16 %v170
    %v462 = vunpack.c.l.b16 %v171
    %v463 = vunpack.c.l.b16 %v172
    %v464 = vunpack.c.l.b16 %v173
    %v465 = vunpack.c.l.b16 %v174
    %v466 = vunpack.c.l.b16 %v175
    %v467 = vunpack.c.l.b16 %v176
    %v468 = vunpack.c.l.b16 %v177
    %v469 = vunpack.c.l.b16 %v178
    %v470 = vunpack.c.l.b16 %v179
    %v471 = vunpack.c.l.b16 %v180
    %v472 = vunpack.c.l.b16 %v181
    %v473 = vunpack.c.l.b16 %v182
    %v474 = vunpack.c.l.b16 %v183
    %v475 = vunpack.c.l.b16 %v184
    %v476 = vunpack.c.l.b16 %v185
    %v477 = vunpack.c.l.b16 %v186
    %v478 = vunpack.c.l.b16 %v187
    %v479 = vunpack.c.l.b16 %v188
    %v480 = vunpack.c.l.b16 %v189
    %v481 = vunpack.c.l.b16 %v190
    %v482 = vunpack.c.l.b16 %v191
    %v483 = vunpack.c.l.b16 %v192
    %v484 = vunpack.c.l.b16 %v193
    %v485 = vunpack.c.l.b16 %v194
    %v486 = vunpack.c.l.b16 %v195
    %v487 = vunpack.c.l.b16 %v196
    %v488 = vunpack.c.l.b16 %v197
    %v489 = vunpack.c.l.b16 %v198
    %v490 = vunpack.c.l.b16 %v199
    %v491 = vunpack.c.l.b16 %v200
    %v492 = vunpack.c.l.b16 %v201
    %v493 = vunpack.c.l.b16 %v202
    %v494 = vunpack.c.l.b16 %v203
    %v495 = vunpack.c.l.b16 %v204
    %v496 = vpack.c.b16 %v369, %v368
    %v497 = vpack.c.b16 %v371, %v370
    %v498 = vpack.c.b16 %v373, %v372
    %v499 = vpack.c.b16 %v375, %v374
    %v500 = vpack.c.b16 %v377, %v376
    %v501 = vpack.c.b16 %v379, %v378
    %v502 = vpack.c.b16 %v381, %v380
    %v503 = vpack.c.b16 %v383, %v382
    %v504 = vpack.c.b16 %v385, %v384
    %v505 = vpack.c.b16 %v387, %v386
    %v506 = vpack.c.b16 %v389, %v388
    %v507 = vpack.c.b16 %v391, %v390
    %v508 = vpack.c.b16 %v393, %v392
    %v509 = vpack.c.b16 %v395, %v394
    %v510 = vpack.c.b16 %v397, %v396
    %v511 = vpack.c.b16 %v399, %v398
    %v512 = vpack.c.b16 %v401, %v400
    %v513 = vpack.c.b16 %v403, %v402
    %v514 = vpack.c.b16 %v405, %v404
    %v515 = vpack.c.b16 %v407, %v406
    %v516 = vpack.c.b16 %v409, %v408
    %v517 = vpack.c.b16 %v411, %v410
    %v518 = vpack.c.b16 %v413, %v412
    %v519 = vpack.c.b16 %v415, %v414
    %v520 = vpack.c.b16 %v417, %v416
    %v521 = vpack.c.b16 %v419, %v418
    %v522 = vpack.c.b16 %v421, %v420
    %v523 = vpack.c.b16 %v423, %v422
    %v524 = vpack.c.b16 %v425, %v424
    %v525 = vpack.c.b16 %v427, %v426
    %v526 = vpack.c.b16 %v429, %v428
    %v527 = vpack.c.b16 %v431, %v430
    %v528 = vpack.c.b16 %v433, %v432
    %v529 = vpack.c.b16 %v435, %v434
    %v530 = vpack.c.b16 %v437, %v436
    %v531 = vpack.c.b16 %v439, %v438
    %v532 = vpack.c.b16 %v441, %v440
    %v533 = vpack.c.b16 %v443, %v442
    %v534 = vpack.c.b16 %v445, %v444
    %v535 = vpack.c.b16 %v447, %v446
    %v536 = vpack.c.b16 %v449, %v448
    %v537 = vpack.c.b16 %v451, %v450
    %v538 = vpack.c.b16 %v453, %v452
    %v539 = vpack.c.b16 %v455, %v454
    %v540 = vpack.c.b16 %v457, %v456
    %v541 = vpack.c.b16 %v459, %v458
    %v542 = vpack.c.b16 %v461, %v460
    %v543 = vpack.c.b16 %v463, %v462
    %v544 = vpack.c.b16 %v465, %v464
    %v545 = vpack.c.b16 %v467, %v466
    %v546 = vpack.c.b16 %v469, %v468
    %v547 = vpack.c.b16 %v471, %v470
    %v548 = vpack.c.b16 %v473, %v472
    %v549 = vpack.c.b16 %v475, %v474
    %v550 = vpack.c.b16 %v477, %v476
    %v551 = vpack.c.b16 %v479, %v478
    %v552 = vpack.c.b16 %v481, %v480
    %v553 = vpack.c.b16 %v483, %v482
    %v554 = vpack.c.b16 %v485, %v484
    %v555 = vpack.c.b16 %v487, %v486
    %v556 = vpack.c.b16 %v489, %v488
    %v557 = vpack.c.b16 %v491, %v490
    %v558 = vpack.c.b16 %v493, %v492
    %v559 = vpack.c.b16 %v495, %v494
    %624 = vmatprep.subr.bf16.mxu0 0
    %625 = vmatpush1.bf16.msra.mxu0 %v503
    %626 = vmatprep.subr.bf16.mxu0 0
    %627 = vmatpush1.bf16.msra.mxu0 %v502
    %628 = vmatprep.subr.bf16.mxu0 0
    %629 = vmatpush1.bf16.msra.mxu0 %v501
    %630 = vmatprep.subr.bf16.mxu0 0
    %631 = vmatpush1.bf16.msra.mxu0 %v500
    %632 = vmatprep.subr.bf16.mxu0 0
    %633 = vmatpush1.bf16.msra.mxu0 %v499
    %634 = vmatprep.subr.bf16.mxu0 0
    %635 = vmatpush1.bf16.msra.mxu0 %v498
    %636 = vmatprep.subr.bf16.mxu0 0
    %637 = vmatpush1.bf16.msra.mxu0 %v497
    %638 = vmatprep.subr.bf16.mxu0 0
    %639 = vmatpush1.bf16.msra.mxu0 %v496
    %640 = vmatprep.subr.bf16.mxu0 0
    %641 = vmatpush2.bf16.msra.mxu0 %v511
    %642 = vmatprep.subr.bf16.mxu0 0
    %643 = vmatpush2.bf16.msra.mxu0 %v510
    %644 = vmatprep.subr.bf16.mxu0 0
    %645 = vmatpush2.bf16.msra.mxu0 %v509
    %646 = vmatprep.subr.bf16.mxu0 0
    %647 = vmatpush2.bf16.msra.mxu0 %v508
    %648 = vmatprep.subr.bf16.mxu0 0
    %649 = vmatpush2.bf16.msra.mxu0 %v507
    %650 = vmatprep.subr.bf16.mxu0 0
    %651 = vmatpush2.bf16.msra.mxu0 %v506
    %652 = vmatprep.subr.bf16.mxu0 0
    %653 = vmatpush2.bf16.msra.mxu0 %v505
    %654 = vmatprep.subr.bf16.mxu0 0
    %655 = vmatpush2.bf16.msra.mxu0 %v504
    %656 = vmatprep.mubr.bf16.mxu0 %v225
    %657 = vmatmul.mubr.bf16.gmra.mxu0 %v224
    %v658 = vpop.f32.mrf.mxu0
    %v659 = vadd.f32 %v210, %v658
    %v660 = vpop.f32.mrf.mxu0
    %v661 = vpop.f32.mrf.mxu0
    %v662 = vpop.f32.mrf.mxu0
    %663 = vdwg.mxu0
    %664 = vmatprep.subr.bf16.mxu0 0
    %665 = vmatpush1.bf16.msra.mxu0 %v519
    %666 = vmatprep.subr.bf16.mxu0 0
    %667 = vmatpush1.bf16.msra.mxu0 %v518
    %668 = vmatprep.subr.bf16.mxu0 0
    %669 = vmatpush1.bf16.msra.mxu0 %v517
    %670 = vmatprep.subr.bf16.mxu0 0
    %671 = vmatpush1.bf16.msra.mxu0 %v516
    %672 = vmatprep.subr.bf16.mxu0 0
    %673 = vmatpush1.bf16.msra.mxu0 %v515
    %674 = vmatprep.subr.bf16.mxu0 0
    %675 = vmatpush1.bf16.msra.mxu0 %v514
    %676 = vmatprep.subr.bf16.mxu0 0
    %677 = vmatpush1.bf16.msra.mxu0 %v513
    %678 = vmatprep.subr.bf16.mxu0 0
    %679 = vmatpush1.bf16.msra.mxu0 %v512
    %680 = vmatprep.subr.bf16.mxu0 0
    %681 = vmatpush2.bf16.msra.mxu0 %v527
    %682 = vmatprep.subr.bf16.mxu0 0
    %683 = vmatpush2.bf16.msra.mxu0 %v526
    %684 = vmatprep.subr.bf16.mxu0 0
    %685 = vmatpush2.bf16.msra.mxu0 %v525
    %686 = vmatprep.subr.bf16.mxu0 0
    %687 = vmatpush2.bf16.msra.mxu0 %v524
    %688 = vmatprep.subr.bf16.mxu0 0
    %689 = vmatpush2.bf16.msra.mxu0 %v523
    %690 = vmatprep.subr.bf16.mxu0 0
    %691 = vmatpush2.bf16.msra.mxu0 %v522
    %692 = vmatprep.subr.bf16.mxu0 0
    %693 = vmatpush2.bf16.msra.mxu0 %v521
    %694 = vmatprep.subr.bf16.mxu0 0
    %695 = vmatpush2.bf16.msra.mxu0 %v520
    %696 = vmatprep.mubr.bf16.mxu0 %v227
    %697 = vmatmul.mubr.bf16.gmra.mxu0 %v226
    %v698 = vpop.f32.mrf.mxu0
    %v699 = vadd.f32 %v659, %v698
    %v700 = vpop.f32.mrf.mxu0
    %v701 = vpop.f32.mrf.mxu0
    %v702 = vpop.f32.mrf.mxu0
    %703 = vdwg.mxu0
    %704 = vmatprep.subr.bf16.mxu0 0
    %705 = vmatpush1.bf16.msra.mxu0 %v535
    %706 = vmatprep.subr.bf16.mxu0 0
    %707 = vmatpush1.bf16.msra.mxu0 %v534
    %708 = vmatprep.subr.bf16.mxu0 0
    %709 = vmatpush1.bf16.msra.mxu0 %v533
    %710 = vmatprep.subr.bf16.mxu0 0
    %711 = vmatpush1.bf16.msra.mxu0 %v532
    %712 = vmatprep.subr.bf16.mxu0 0
    %713 = vmatpush1.bf16.msra.mxu0 %v531
    %714 = vmatprep.subr.bf16.mxu0 0
    %715 = vmatpush1.bf16.msra.mxu0 %v530
    %716 = vmatprep.subr.bf16.mxu0 0
    %717 = vmatpush1.bf16.msra.mxu0 %v529
    %718 = vmatprep.subr.bf16.mxu0 0
    %719 = vmatpush1.bf16.msra.mxu0 %v528
    %720 = vmatprep.subr.bf16.mxu0 0
    %721 = vmatpush2.bf16.msra.mxu0 %v543
    %722 = vmatprep.subr.bf16.mxu0 0
    %723 = vmatpush2.bf16.msra.mxu0 %v542
    %724 = vmatprep.subr.bf16.mxu0 0
    %725 = vmatpush2.bf16.msra.mxu0 %v541
    %726 = vmatprep.subr.bf16.mxu0 0
    %727 = vmatpush2.bf16.msra.mxu0 %v540
    %728 = vmatprep.subr.bf16.mxu0 0
    %729 = vmatpush2.bf16.msra.mxu0 %v539
    %730 = vmatprep.subr.bf16.mxu0 0
    %731 = vmatpush2.bf16.msra.mxu0 %v538
    %732 = vmatprep.subr.bf16.mxu0 0
    %733 = vmatpush2.bf16.msra.mxu0 %v537
    %734 = vmatprep.subr.bf16.mxu0 0
    %735 = vmatpush2.bf16.msra.mxu0 %v536
    %736 = vmatprep.mubr.bf16.mxu0 %v229
    %737 = vmatmul.mubr.bf16.gmra.mxu0 %v228
    %v738 = vpop.f32.mrf.mxu0
    %v739 = vadd.f32 %v699, %v738
    %v740 = vpop.f32.mrf.mxu0
    %v741 = vpop.f32.mrf.mxu0
    %v742 = vpop.f32.mrf.mxu0
    %743 = vdwg.mxu0
    %744 = vmatprep.subr.bf16.mxu0 0
    %745 = vmatpush1.bf16.msra.mxu0 %v551
    %746 = vmatprep.subr.bf16.mxu0 0
    %747 = vmatpush1.bf16.msra.mxu0 %v550
    %748 = vmatprep.subr.bf16.mxu0 0
    %749 = vmatpush1.bf16.msra.mxu0 %v549
    %750 = vmatprep.subr.bf16.mxu0 0
    %751 = vmatpush1.bf16.msra.mxu0 %v548
    %752 = vmatprep.subr.bf16.mxu0 0
    %753 = vmatpush1.bf16.msra.mxu0 %v547
    %754 = vmatprep.subr.bf16.mxu0 0
    %755 = vmatpush1.bf16.msra.mxu0 %v546
    %756 = vmatprep.subr.bf16.mxu0 0
    %757 = vmatpush1.bf16.msra.mxu0 %v545
    %758 = vmatprep.subr.bf16.mxu0 0
    %759 = vmatpush1.bf16.msra.mxu0 %v544
    %760 = vmatprep.subr.bf16.mxu0 0
    %761 = vmatpush2.bf16.msra.mxu0 %v559
    %762 = vmatprep.subr.bf16.mxu0 0
    %763 = vmatpush2.bf16.msra.mxu0 %v558
    %764 = vmatprep.subr.bf16.mxu0 0
    %765 = vmatpush2.bf16.msra.mxu0 %v557
    %766 = vmatprep.subr.bf16.mxu0 0
    %767 = vmatpush2.bf16.msra.mxu0 %v556
    %768 = vmatprep.subr.bf16.mxu0 0
    %769 = vmatpush2.bf16.msra.mxu0 %v555
    %770 = vmatprep.subr.bf16.mxu0 0
    %771 = vmatpush2.bf16.msra.mxu0 %v554
    %772 = vmatprep.subr.bf16.mxu0 0
    %773 = vmatpush2.bf16.msra.mxu0 %v553
    %774 = vmatprep.subr.bf16.mxu0 0
    %775 = vmatpush2.bf16.msra.mxu0 %v552
    %776 = vmatprep.mubr.bf16.mxu0 %v231
    %777 = vmatmul.mubr.bf16.gmra.mxu0 %v230
    %v778 = vpop.f32.mrf.mxu0
    %v779 = vadd.f32 %v739, %v778
    %v780 = vpop.f32.mrf.mxu0
    %v781 = vpop.f32.mrf.mxu0
    %v782 = vpop.f32.mrf.mxu0
    %783 = vdwg.mxu0
    %v784 = vmax.f32 %v779, 0.0
    %v785 = vpack.c.bf16 %v784, %v784
    %v786 = vld [vmem:[#allocation7] sm:$0xff]
    %v787 = vld [vmem:[#allocation7 + $0x8] sm:$0xff]
    %v788 = vld [vmem:[#allocation7 + $0x10] sm:$0xff]
    %v789 = vld [vmem:[#allocation7 + $0x18] sm:$0xff]
    %v790 = vld [vmem:[#allocation7 + $0x20] sm:$0xff]
    %v791 = vld [vmem:[#allocation7 + $0x28] sm:$0xff]
    %v792 = vld [vmem:[#allocation7 + $0x30] sm:$0xff]
    %v793 = vld [vmem:[#allocation7 + $0x38] sm:$0xff]
    %v794 = vld [vmem:[#allocation7 + $0x40] sm:$0xff]
    %v795 = vld [vmem:[#allocation7 + $0x48] sm:$0xff]
    %v796 = vld [vmem:[#allocation7 + $0x50] sm:$0xff]
    %v797 = vld [vmem:[#allocation7 + $0x58] sm:$0xff]
    %v798 = vld [vmem:[#allocation7 + $0x60] sm:$0xff]
    %v799 = vld [vmem:[#allocation7 + $0x68] sm:$0xff]
    %v800 = vld [vmem:[#allocation7 + $0x70] sm:$0xff]
    %v801 = vld [vmem:[#allocation7 + $0x78] sm:$0xff]
    %v802 = vld [vmem:[#allocation7 + $0x80] sm:$0xff]
    %v803 = vld [vmem:[#allocation7 + $0x88] sm:$0xff]
    %v804 = vld [vmem:[#allocation7 + $0x90] sm:$0xff]
    %v805 = vld [vmem:[#allocation7 + $0x98] sm:$0xff]
    %v806 = vld [vmem:[#allocation7 + $0xa0] sm:$0xff]
    %v807 = vld [vmem:[#allocation7 + $0xa8] sm:$0xff]
    %v808 = vld [vmem:[#allocation7 + $0xb0] sm:$0xff]
    %v809 = vld [vmem:[#allocation7 + $0xb8] sm:$0xff]
    %v810 = vld [vmem:[#allocation7 + $0xc0] sm:$0xff]
    %v811 = vld [vmem:[#allocation7 + $0xc8] sm:$0xff]
    %v812 = vld [vmem:[#allocation7 + $0xd0] sm:$0xff]
    %v813 = vld [vmem:[#allocation7 + $0xd8] sm:$0xff]
    %v814 = vld [vmem:[#allocation7 + $0xe0] sm:$0xff]
    %v815 = vld [vmem:[#allocation7 + $0xe8] sm:$0xff]
    %v816 = vld [vmem:[#allocation7 + $0xf0] sm:$0xff]
    %v817 = vld [vmem:[#allocation7 + $0xf8] sm:$0xff]
    %v818 = vld [vmem:[#allocation7 + $0x100] sm:$0xff]
    %v819 = vld [vmem:[#allocation7 + $0x108] sm:$0xff]
    %v820 = vld [vmem:[#allocation7 + $0x110] sm:$0xff]
    %v821 = vld [vmem:[#allocation7 + $0x118] sm:$0xff]
    %v822 = vld [vmem:[#allocation7 + $0x120] sm:$0xff]
    %v823 = vld [vmem:[#allocation7 + $0x128] sm:$0xff]
    %v824 = vld [vmem:[#allocation7 + $0x130] sm:$0xff]
    %v825 = vld [vmem:[#allocation7 + $0x138] sm:$0xff]
    %v826 = vld [vmem:[#allocation7 + $0x140] sm:$0xff]
    %v827 = vld [vmem:[#allocation7 + $0x148] sm:$0xff]
    %v828 = vld [vmem:[#allocation7 + $0x150] sm:$0xff]
    %v829 = vld [vmem:[#allocation7 + $0x158] sm:$0xff]
    %v830 = vld [vmem:[#allocation7 + $0x160] sm:$0xff]
    %v831 = vld [vmem:[#allocation7 + $0x168] sm:$0xff]
    %v832 = vld [vmem:[#allocation7 + $0x170] sm:$0xff]
    %v833 = vld [vmem:[#allocation7 + $0x178] sm:$0xff]
    %v834 = vld [vmem:[#allocation7 + $0x180] sm:$0xff]
    %v835 = vld [vmem:[#allocation7 + $0x188] sm:$0xff]
    %v836 = vld [vmem:[#allocation7 + $0x190] sm:$0xff]
    %v837 = vld [vmem:[#allocation7 + $0x198] sm:$0xff]
    %v838 = vld [vmem:[#allocation7 + $0x1a0] sm:$0xff]
    %v839 = vld [vmem:[#allocation7 + $0x1a8] sm:$0xff]
    %v840 = vld [vmem:[#allocation7 + $0x1b0] sm:$0xff]
    %v841 = vld [vmem:[#allocation7 + $0x1b8] sm:$0xff]
    %v842 = vld [vmem:[#allocation7 + $0x1c0] sm:$0xff]
    %v843 = vld [vmem:[#allocation7 + $0x1c8] sm:$0xff]
    %v844 = vld [vmem:[#allocation7 + $0x1d0] sm:$0xff]
    %v845 = vld [vmem:[#allocation7 + $0x1d8] sm:$0xff]
    %v846 = vld [vmem:[#allocation7 + $0x1e0] sm:$0xff]
    %v847 = vld [vmem:[#allocation7 + $0x1e8] sm:$0xff]
    %v848 = vld [vmem:[#allocation7 + $0x1f0] sm:$0xff]
    %v849 = vld [vmem:[#allocation7 + $0x1f8] sm:$0xff]
    %v850 = vld [vmem:[#allocation8] sm:$0xff]
    %v852 = vlaneseq
    %v853 = vshrl.u32 %v852, 7
    %v854 = vsub.s32 0, %v853
    %v855 = vrot.slane %v850, %v854
    %v856 = vlaneseq
    %v857 = vshrl.u32 %v856, 7
    %v858 = vsub.s32 1, %v857
    %v859 = vrot.slane %v850, %v858
    %v860 = vlaneseq
    %v861 = vshrl.u32 %v860, 7
    %v862 = vsub.s32 2, %v861
    %v863 = vrot.slane %v850, %v862
    %v864 = vlaneseq
    %v865 = vshrl.u32 %v864, 7
    %v866 = vsub.s32 3, %v865
    %v867 = vrot.slane %v850, %v866
    %v868 = vlaneseq
    %v869 = vshrl.u32 %v868, 7
    %v870 = vsub.s32 4, %v869
    %v871 = vrot.slane %v850, %v870
    %v872 = vlaneseq
    %v873 = vshrl.u32 %v872, 7
    %v874 = vsub.s32 5, %v873
    %v875 = vrot.slane %v850, %v874
    %v876 = vlaneseq
    %v877 = vshrl.u32 %v876, 7
    %v878 = vsub.s32 6, %v877
    %v879 = vrot.slane %v850, %v878
    %v880 = vlaneseq
    %v881 = vshrl.u32 %v880, 7
    %v882 = vsub.s32 7, %v881
    %v883 = vrot.slane %v850, %v882
    %v956 = vunpack.c.l.b16 %v786
    %v957 = vunpack.c.h.b16 %v786
    %v958 = vunpack.c.l.b16 %v787
    %v959 = vunpack.c.h.b16 %v787
    %v960 = vunpack.c.l.b16 %v788
    %v961 = vunpack.c.h.b16 %v788
    %v962 = vunpack.c.l.b16 %v789
    %v963 = vunpack.c.h.b16 %v789
    %v964 = vunpack.c.l.b16 %v790
    %v965 = vunpack.c.h.b16 %v790
    %v966 = vunpack.c.l.b16 %v791
    %v967 = vunpack.c.h.b16 %v791
    %v968 = vunpack.c.l.b16 %v792
    %v969 = vunpack.c.h.b16 %v792
    %v970 = vunpack.c.l.b16 %v793
    %v971 = vunpack.c.h.b16 %v793
    %v972 = vunpack.c.l.b16 %v794
    %v973 = vunpack.c.h.b16 %v794
    %v974 = vunpack.c.l.b16 %v795
    %v975 = vunpack.c.h.b16 %v795
    %v976 = vunpack.c.l.b16 %v796
    %v977 = vunpack.c.h.b16 %v796
    %v978 = vunpack.c.l.b16 %v797
    %v979 = vunpack.c.h.b16 %v797
    %v980 = vunpack.c.l.b16 %v798
    %v981 = vunpack.c.h.b16 %v798
    %v982 = vunpack.c.l.b16 %v799
    %v983 = vunpack.c.h.b16 %v799
    %v984 = vunpack.c.l.b16 %v800
    %v985 = vunpack.c.h.b16 %v800
    %v986 = vunpack.c.l.b16 %v801
    %v987 = vunpack.c.h.b16 %v801
    %v988 = vunpack.c.l.b16 %v802
    %v989 = vunpack.c.h.b16 %v802
    %v990 = vunpack.c.l.b16 %v803
    %v991 = vunpack.c.h.b16 %v803
    %v992 = vunpack.c.l.b16 %v804
    %v993 = vunpack.c.h.b16 %v804
    %v994 = vunpack.c.l.b16 %v805
    %v995 = vunpack.c.h.b16 %v805
    %v996 = vunpack.c.l.b16 %v806
    %v997 = vunpack.c.h.b16 %v806
    %v998 = vunpack.c.l.b16 %v807
    %v999 = vunpack.c.h.b16 %v807
    %v1000 = vunpack.c.l.b16 %v808
    %v1001 = vunpack.c.h.b16 %v808
    %v1002 = vunpack.c.l.b16 %v809
    %v1003 = vunpack.c.h.b16 %v809
    %v1004 = vunpack.c.l.b16 %v810
    %v1005 = vunpack.c.h.b16 %v810
    %v1006 = vunpack.c.l.b16 %v811
    %v1007 = vunpack.c.h.b16 %v811
    %v1008 = vunpack.c.l.b16 %v812
    %v1009 = vunpack.c.h.b16 %v812
    %v1010 = vunpack.c.l.b16 %v813
    %v1011 = vunpack.c.h.b16 %v813
    %v1012 = vunpack.c.l.b16 %v814
    %v1013 = vunpack.c.h.b16 %v814
    %v1014 = vunpack.c.l.b16 %v815
    %v1015 = vunpack.c.h.b16 %v815
    %v1016 = vunpack.c.l.b16 %v816
    %v1017 = vunpack.c.h.b16 %v816
    %v1018 = vunpack.c.l.b16 %v817
    %v1019 = vunpack.c.h.b16 %v817
    %v1020 = vunpack.c.l.b16 %v818
    %v1021 = vunpack.c.h.b16 %v818
    %v1022 = vunpack.c.l.b16 %v819
    %v1023 = vunpack.c.h.b16 %v819
    %v1024 = vunpack.c.l.b16 %v820
    %v1025 = vunpack.c.h.b16 %v820
    %v1026 = vunpack.c.l.b16 %v821
    %v1027 = vunpack.c.h.b16 %v821
    %v1028 = vunpack.c.l.b16 %v822
    %v1029 = vunpack.c.h.b16 %v822
    %v1030 = vunpack.c.l.b16 %v823
    %v1031 = vunpack.c.h.b16 %v823
    %v1032 = vunpack.c.l.b16 %v824
    %v1033 = vunpack.c.h.b16 %v824
    %v1034 = vunpack.c.l.b16 %v825
    %v1035 = vunpack.c.h.b16 %v825
    %v1036 = vunpack.c.l.b16 %v826
    %v1037 = vunpack.c.h.b16 %v826
    %v1038 = vunpack.c.l.b16 %v827
    %v1039 = vunpack.c.h.b16 %v827
    %v1040 = vunpack.c.l.b16 %v828
    %v1041 = vunpack.c.h.b16 %v828
    %v1042 = vunpack.c.l.b16 %v829
    %v1043 = vunpack.c.h.b16 %v829
    %v1044 = vunpack.c.l.b16 %v830
    %v1045 = vunpack.c.h.b16 %v830
    %v1046 = vunpack.c.l.b16 %v831
    %v1047 = vunpack.c.h.b16 %v831
    %v1048 = vunpack.c.l.b16 %v832
    %v1049 = vunpack.c.h.b16 %v832
    %v1050 = vunpack.c.l.b16 %v833
    %v1051 = vunpack.c.h.b16 %v833
    %v1052 = vunpack.c.l.b16 %v834
    %v1053 = vunpack.c.h.b16 %v834
    %v1054 = vunpack.c.l.b16 %v835
    %v1055 = vunpack.c.h.b16 %v835
    %v1056 = vunpack.c.l.b16 %v836
    %v1057 = vunpack.c.h.b16 %v836
    %v1058 = vunpack.c.l.b16 %v837
    %v1059 = vunpack.c.h.b16 %v837
    %v1060 = vunpack.c.l.b16 %v838
    %v1061 = vunpack.c.h.b16 %v838
    %v1062 = vunpack.c.l.b16 %v839
    %v1063 = vunpack.c.h.b16 %v839
    %v1064 = vunpack.c.l.b16 %v840
    %v1065 = vunpack.c.h.b16 %v840
    %v1066 = vunpack.c.l.b16 %v841
    %v1067 = vunpack.c.h.b16 %v841
    %v1068 = vunpack.c.l.b16 %v842
    %v1069 = vunpack.c.h.b16 %v842
    %v1070 = vunpack.c.l.b16 %v843
    %v1071 = vunpack.c.h.b16 %v843
    %v1072 = vunpack.c.l.b16 %v844
    %v1073 = vunpack.c.h.b16 %v844
    %v1074 = vunpack.c.l.b16 %v845
    %v1075 = vunpack.c.h.b16 %v845
    %v1076 = vunpack.c.l.b16 %v846
    %v1077 = vunpack.c.h.b16 %v846
    %v1078 = vunpack.c.l.b16 %v847
    %v1079 = vunpack.c.h.b16 %v847
    %v1080 = vunpack.c.l.b16 %v848
    %v1081 = vunpack.c.h.b16 %v848
    %v1082 = vunpack.c.l.b16 %v849
    %v1083 = vunpack.c.h.b16 %v849
    %v1084 = vpack.c.b16 %v964, %v956
    %v1085 = vpack.c.b16 %v965, %v957
    %v1086 = vpack.c.b16 %v966, %v958
    %v1087 = vpack.c.b16 %v967, %v959
    %v1088 = vpack.c.b16 %v968, %v960
    %v1089 = vpack.c.b16 %v969, %v961
    %v1090 = vpack.c.b16 %v970, %v962
    %v1091 = vpack.c.b16 %v971, %v963
    %v1092 = vpack.c.b16 %v980, %v972
    %v1093 = vpack.c.b16 %v981, %v973
    %v1094 = vpack.c.b16 %v982, %v974
    %v1095 = vpack.c.b16 %v983, %v975
    %v1096 = vpack.c.b16 %v984, %v976
    %v1097 = vpack.c.b16 %v985, %v977
    %v1098 = vpack.c.b16 %v986, %v978
    %v1099 = vpack.c.b16 %v987, %v979
    %v1100 = vpack.c.b16 %v996, %v988
    %v1101 = vpack.c.b16 %v997, %v989
    %v1102 = vpack.c.b16 %v998, %v990
    %v1103 = vpack.c.b16 %v999, %v991
    %v1104 = vpack.c.b16 %v1000, %v992
    %v1105 = vpack.c.b16 %v1001, %v993
    %v1106 = vpack.c.b16 %v1002, %v994
    %v1107 = vpack.c.b16 %v1003, %v995
    %v1108 = vpack.c.b16 %v1012, %v1004
    %v1109 = vpack.c.b16 %v1013, %v1005
    %v1110 = vpack.c.b16 %v1014, %v1006
    %v1111 = vpack.c.b16 %v1015, %v1007
    %v1112 = vpack.c.b16 %v1016, %v1008
    %v1113 = vpack.c.b16 %v1017, %v1009
    %v1114 = vpack.c.b16 %v1018, %v1010
    %v1115 = vpack.c.b16 %v1019, %v1011
    %v1116 = vpack.c.b16 %v1028, %v1020
    %v1117 = vpack.c.b16 %v1029, %v1021
    %v1118 = vpack.c.b16 %v1030, %v1022
    %v1119 = vpack.c.b16 %v1031, %v1023
    %v1120 = vpack.c.b16 %v1032, %v1024
    %v1121 = vpack.c.b16 %v1033, %v1025
    %v1122 = vpack.c.b16 %v1034, %v1026
    %v1123 = vpack.c.b16 %v1035, %v1027
    %v1124 = vpack.c.b16 %v1044, %v1036
    %v1125 = vpack.c.b16 %v1045, %v1037
    %v1126 = vpack.c.b16 %v1046, %v1038
    %v1127 = vpack.c.b16 %v1047, %v1039
    %v1128 = vpack.c.b16 %v1048, %v1040
    %v1129 = vpack.c.b16 %v1049, %v1041
    %v1130 = vpack.c.b16 %v1050, %v1042
    %v1131 = vpack.c.b16 %v1051, %v1043
    %v1132 = vpack.c.b16 %v1060, %v1052
    %v1133 = vpack.c.b16 %v1061, %v1053
    %v1134 = vpack.c.b16 %v1062, %v1054
    %v1135 = vpack.c.b16 %v1063, %v1055
    %v1136 = vpack.c.b16 %v1064, %v1056
    %v1137 = vpack.c.b16 %v1065, %v1057
    %v1138 = vpack.c.b16 %v1066, %v1058
    %v1139 = vpack.c.b16 %v1067, %v1059
    %v1140 = vpack.c.b16 %v1076, %v1068
    %v1141 = vpack.c.b16 %v1077, %v1069
    %v1142 = vpack.c.b16 %v1078, %v1070
    %v1143 = vpack.c.b16 %v1079, %v1071
    %v1144 = vpack.c.b16 %v1080, %v1072
    %v1145 = vpack.c.b16 %v1081, %v1073
    %v1146 = vpack.c.b16 %v1082, %v1074
    %v1147 = vpack.c.b16 %v1083, %v1075
    %1212 = vmatprep.subr.bf16.mxu0 %v1141
    %1213 = vmatpush1.bf16.msra.mxu0 %v1140
    %1214 = vmatprep.subr.bf16.mxu0 %v1133
    %1215 = vmatpush1.bf16.msra.mxu0 %v1132
    %1216 = vmatprep.subr.bf16.mxu0 %v1125
    %1217 = vmatpush1.bf16.msra.mxu0 %v1124
    %1218 = vmatprep.subr.bf16.mxu0 %v1117
    %1219 = vmatpush1.bf16.msra.mxu0 %v1116
    %1220 = vmatprep.subr.bf16.mxu0 %v1109
    %1221 = vmatpush1.bf16.msra.mxu0 %v1108
    %1222 = vmatprep.subr.bf16.mxu0 %v1101
    %1223 = vmatpush1.bf16.msra.mxu0 %v1100
    %1224 = vmatprep.subr.bf16.mxu0 %v1093
    %1225 = vmatpush1.bf16.msra.mxu0 %v1092
    %1226 = vmatprep.subr.bf16.mxu0 %v1085
    %1227 = vmatpush1.bf16.msra.mxu0 %v1084
    %1228 = vmatprep.subr.bf16.mxu0 0
    %1229 = vmatpush2.bf16.msra.mxu0 0
    %1230 = vmatprep.subr.bf16.mxu0 0
    %1231 = vmatpush2.bf16.msra.mxu0 0
    %1232 = vmatprep.subr.bf16.mxu0 0
    %1233 = vmatpush2.bf16.msra.mxu0 0
    %1234 = vmatprep.subr.bf16.mxu0 0
    %1235 = vmatpush2.bf16.msra.mxu0 0
    %1236 = vmatprep.subr.bf16.mxu0 0
    %1237 = vmatpush2.bf16.msra.mxu0 0
    %1238 = vmatprep.subr.bf16.mxu0 0
    %1239 = vmatpush2.bf16.msra.mxu0 0
    %1240 = vmatprep.subr.bf16.mxu0 0
    %1241 = vmatpush2.bf16.msra.mxu0 0
    %1242 = vmatprep.subr.bf16.mxu0 0
    %1243 = vmatpush2.bf16.msra.mxu0 0
    %1244 = vmatprep.mubr.bf16.mxu0 0
    %1245 = vmatmul.mubr.bf16.gmra.mxu0 %v785
    %v1246 = vpop.f32.mrf.mxu0
    %v1247 = vadd.f32 %v855, %v1246
    %v1248 = vpop.f32.mrf.mxu0
    %v1249 = vadd.f32 %v859, %v1248
    %v1250 = vpop.f32.mrf.mxu0
    %v1251 = vpop.f32.mrf.mxu0
    %1252 = vdwg.mxu0
    %1253 = vmatprep.subr.bf16.mxu0 %v1143
    %1254 = vmatpush1.bf16.msra.mxu0 %v1142
    %1255 = vmatprep.subr.bf16.mxu0 %v1135
    %1256 = vmatpush1.bf16.msra.mxu0 %v1134
    %1257 = vmatprep.subr.bf16.mxu0 %v1127
    %1258 = vmatpush1.bf16.msra.mxu0 %v1126
    %1259 = vmatprep.subr.bf16.mxu0 %v1119
    %1260 = vmatpush1.bf16.msra.mxu0 %v1118
    %1261 = vmatprep.subr.bf16.mxu0 %v1111
    %1262 = vmatpush1.bf16.msra.mxu0 %v1110
    %1263 = vmatprep.subr.bf16.mxu0 %v1103
    %1264 = vmatpush1.bf16.msra.mxu0 %v1102
    %1265 = vmatprep.subr.bf16.mxu0 %v1095
    %1266 = vmatpush1.bf16.msra.mxu0 %v1094
    %1267 = vmatprep.subr.bf16.mxu0 %v1087
    %1268 = vmatpush1.bf16.msra.mxu0 %v1086
    %1269 = vmatprep.subr.bf16.mxu0 0
    %1270 = vmatpush2.bf16.msra.mxu0 0
    %1271 = vmatprep.subr.bf16.mxu0 0
    %1272 = vmatpush2.bf16.msra.mxu0 0
    %1273 = vmatprep.subr.bf16.mxu0 0
    %1274 = vmatpush2.bf16.msra.mxu0 0
    %1275 = vmatprep.subr.bf16.mxu0 0
    %1276 = vmatpush2.bf16.msra.mxu0 0
    %1277 = vmatprep.subr.bf16.mxu0 0
    %1278 = vmatpush2.bf16.msra.mxu0 0
    %1279 = vmatprep.subr.bf16.mxu0 0
    %1280 = vmatpush2.bf16.msra.mxu0 0
    %1281 = vmatprep.subr.bf16.mxu0 0
    %1282 = vmatpush2.bf16.msra.mxu0 0
    %1283 = vmatprep.subr.bf16.mxu0 0
    %1284 = vmatpush2.bf16.msra.mxu0 0
    %1285 = vmatprep.mubr.bf16.mxu0 0
    %1286 = vmatmul.mubr.bf16.gmra.mxu0 %v785
    %v1287 = vpop.f32.mrf.mxu0
    %v1288 = vadd.f32 %v863, %v1287
    %v1289 = vpop.f32.mrf.mxu0
    %v1290 = vadd.f32 %v867, %v1289
    %v1291 = vpop.f32.mrf.mxu0
    %v1292 = vpop.f32.mrf.mxu0
    %1293 = vdwg.mxu0
    %1294 = vmatprep.subr.bf16.mxu0 %v1145
    %1295 = vmatpush1.bf16.msra.mxu0 %v1144
    %1296 = vmatprep.subr.bf16.mxu0 %v1137
    %1297 = vmatpush1.bf16.msra.mxu0 %v1136
    %1298 = vmatprep.subr.bf16.mxu0 %v1129
    %1299 = vmatpush1.bf16.msra.mxu0 %v1128
    %1300 = vmatprep.subr.bf16.mxu0 %v1121
    %1301 = vmatpush1.bf16.msra.mxu0 %v1120
    %1302 = vmatprep.subr.bf16.mxu0 %v1113
    %1303 = vmatpush1.bf16.msra.mxu0 %v1112
    %1304 = vmatprep.subr.bf16.mxu0 %v1105
    %1305 = vmatpush1.bf16.msra.mxu0 %v1104
    %1306 = vmatprep.subr.bf16.mxu0 %v1097
    %1307 = vmatpush1.bf16.msra.mxu0 %v1096
    %1308 = vmatprep.subr.bf16.mxu0 %v1089
    %1309 = vmatpush1.bf16.msra.mxu0 %v1088
    %1310 = vmatprep.subr.bf16.mxu0 0
    %1311 = vmatpush2.bf16.msra.mxu0 0
    %1312 = vmatprep.subr.bf16.mxu0 0
    %1313 = vmatpush2.bf16.msra.mxu0 0
    %1314 = vmatprep.subr.bf16.mxu0 0
    %1315 = vmatpush2.bf16.msra.mxu0 0
    %1316 = vmatprep.subr.bf16.mxu0 0
    %1317 = vmatpush2.bf16.msra.mxu0 0
    %1318 = vmatprep.subr.bf16.mxu0 0
    %1319 = vmatpush2.bf16.msra.mxu0 0
    %1320 = vmatprep.subr.bf16.mxu0 0
    %1321 = vmatpush2.bf16.msra.mxu0 0
    %1322 = vmatprep.subr.bf16.mxu0 0
    %1323 = vmatpush2.bf16.msra.mxu0 0
    %1324 = vmatprep.subr.bf16.mxu0 0
    %1325 = vmatpush2.bf16.msra.mxu0 0
    %1326 = vmatprep.mubr.bf16.mxu0 0
    %1327 = vmatmul.mubr.bf16.gmra.mxu0 %v785
    %v1328 = vpop.f32.mrf.mxu0
    %v1329 = vadd.f32 %v871, %v1328
    %v1330 = vpop.f32.mrf.mxu0
    %v1331 = vadd.f32 %v875, %v1330
    %v1332 = vpop.f32.mrf.mxu0
    %v1333 = vpop.f32.mrf.mxu0
    %1334 = vdwg.mxu0
    %1335 = vmatprep.subr.bf16.mxu0 %v1147
    %1336 = vmatpush1.bf16.msra.mxu0 %v1146
    %1337 = vmatprep.subr.bf16.mxu0 %v1139
    %1338 = vmatpush1.bf16.msra.mxu0 %v1138
    %1339 = vmatprep.subr.bf16.mxu0 %v1131
    %1340 = vmatpush1.bf16.msra.mxu0 %v1130
    %1341 = vmatprep.subr.bf16.mxu0 %v1123
    %1342 = vmatpush1.bf16.msra.mxu0 %v1122
    %1343 = vmatprep.subr.bf16.mxu0 %v1115
    %1344 = vmatpush1.bf16.msra.mxu0 %v1114
    %1345 = vmatprep.subr.bf16.mxu0 %v1107
    %1346 = vmatpush1.bf16.msra.mxu0 %v1106
    %1347 = vmatprep.subr.bf16.mxu0 %v1099
    %1348 = vmatpush1.bf16.msra.mxu0 %v1098
    %1349 = vmatprep.subr.bf16.mxu0 %v1091
    %1350 = vmatpush1.bf16.msra.mxu0 %v1090
    %1351 = vmatprep.subr.bf16.mxu0 0
    %1352 = vmatpush2.bf16.msra.mxu0 0
    %1353 = vmatprep.subr.bf16.mxu0 0
    %1354 = vmatpush2.bf16.msra.mxu0 0
    %1355 = vmatprep.subr.bf16.mxu0 0
    %1356 = vmatpush2.bf16.msra.mxu0 0
    %1357 = vmatprep.subr.bf16.mxu0 0
    %1358 = vmatpush2.bf16.msra.mxu0 0
    %1359 = vmatprep.subr.bf16.mxu0 0
    %1360 = vmatpush2.bf16.msra.mxu0 0
    %1361 = vmatprep.subr.bf16.mxu0 0
    %1362 = vmatpush2.bf16.msra.mxu0 0
    %1363 = vmatprep.subr.bf16.mxu0 0
    %1364 = vmatpush2.bf16.msra.mxu0 0
    %1365 = vmatprep.subr.bf16.mxu0 0
    %1366 = vmatpush2.bf16.msra.mxu0 0
    %1367 = vmatprep.mubr.bf16.mxu0 0
    %1368 = vmatmul.mubr.bf16.gmra.mxu0 %v785
    %v1369 = vpop.f32.mrf.mxu0
    %v1370 = vadd.f32 %v879, %v1369
    %v1371 = vpop.f32.mrf.mxu0
    %v1372 = vadd.f32 %v883, %v1371
    %v1373 = vpop.f32.mrf.mxu0
    %v1374 = vpop.f32.mrf.mxu0
    %1375 = vdwg.mxu0
    %1376 = vst [vmem:[#allocation10] sm:$0xff] %v1247
    %1377 = vst [vmem:[#allocation10 + $0x8] sm:$0xff] %v1249
    %1378 = vst [vmem:[#allocation10 + $0x10] sm:$0xff] %v1288
    %1379 = vst [vmem:[#allocation10 + $0x18] sm:$0xff] %v1290
    %1380 = vst [vmem:[#allocation10 + $0x20] sm:$0xff] %v1329
    %1381 = vst [vmem:[#allocation10 + $0x28] sm:$0xff] %v1331
    %1382 = vst [vmem:[#allocation10 + $0x30] sm:$0xff] %v1370
    %1383 = vst [vmem:[#allocation10 + $0x38] sm:$0xff] %v1372
    // Predicated region
    $region38: #{tpu_custom_call.1} parent=1 // pred_check
      _
    $region39: #{tpu_custom_call.1} parent=1 // pred_check_branch
      %1385 = sbr.rel (0) target = $region41
    $region40: #{tpu_custom_call.1} parent=1 // pred_region
      %s1387 = ssub.s32 1024, 1024
      %1388 = vsyncadd [#allocation4], %s1387
      %s1390 = sshll.u32 [#allocation10], 4
      %s1391 = int_to_ptr.vmem [resolvable:$true] %s1390
      %1393 = dma.vmem_to_hbm [thread:$0]  %s1391, 1024, %s5, [#allocation4]
    $region41: #{tpu_custom_call.1} parent=1 // pred_fallthru
      _
    // Predicated region
    $region42: #{tpu_custom_call.1} parent=1 // pred_check
      _
    $region43: #{tpu_custom_call.1} parent=1 // pred_check_branch
      %1395 = sbr.rel (0) target = $region45
    $region44: #{tpu_custom_call.1} parent=1 // pred_region
      %1396 = dma.done [#allocation4], 1024
    $region45: #{tpu_custom_call.1} parent=1 // pred_fallthru
      _
    %1397 = vsyncpa [#allocation3], 1
    %1398 = vsyncpa [#allocation6], 1
    %1399 = vsyncpa [#allocation9], 1
    %1400 = vsyncpa [#allocation4], 1

// kernel: tpu_custom_call.1
$region0: #{tpu_custom_call.1}
  #allocation0 [shape = 'u32[]', space=smem, size = 0x4, offset = 0x4, fixed_abs, tag = 'smem constant byte address 0x4 - core index']
  #allocation1 [shape = 'u32[144,128]{1,0:T(1,128)}', space=vmem, size = 0x12000, scoped, tag = 'internal scratch']
  %s0 = inlined_call_operand.hbm [shape: bf16[8,1024], index: 0, kind: input, shape index: {}]
  %s1 = inlined_call_operand.hbm [shape: bf16[1024,128], index: 1, kind: input, shape index: {}]
  %s2 = inlined_call_operand.vmem [shape: f32[1,128], index: 2, kind: input, shape index: {}]
  %s3 = inlined_call_operand.hbm [shape: bf16[128,1024], index: 3, kind: input, shape index: {}]
  %s4 = inlined_call_operand.hbm [shape: f32[1,1024], index: 4, kind: input, shape index: {}]
  %s5 = inlined_call_operand.hbm [shape: f32[8,1024], index: 5, kind: output, shape index: {}]
  %s6 = sld [smem:[#allocation0]]
  $region46: #{tpu_custom_call.1} parent=0
    _
  %s8 = ssub.s32 1, %s6
  %s9 = scalar_select 0, %s8, %s6
  $region1: #{tpu_custom_call.1} parent=0
    #allocation2 [shape = 'u8[16384]{0}', space=vmem, size = 0x4000, scoped, tag = 'input window, operand 0, single buffered']
    #allocation3 [shape = 's32[1]{0}', space=sflag, size = 0x4, scoped, tag = 'scoped memory for tpu_custom_call.1']
    #allocation4 [shape = 's32[1]{0}', space=sflag, size = 0x4, scoped, tag = 'scoped memory for tpu_custom_call.1']
    #allocation5 [shape = 'u8[262144]{0}', space=vmem, size = 0x40000, scoped, tag = 'input window, operand 1, single buffered']
    #allocation6 [shape = 's32[1]{0}', space=sflag, size = 0x4, scoped, tag = 'scoped memory for tpu_custom_call.1']
    #allocation7 [shape = 'u8[262144]{0}', space=vmem, size = 0x40000, scoped, tag = 'input window, operand 3, single buffered']
    #allocation8 [shape = 'u8[4096]{0}', space=vmem, size = 0x1000, scoped, tag = 'input window, operand 4, single buffered']
    #allocation9 [shape = 's32[1]{0}', space=sflag, size = 0x4, scoped, tag = 'scoped memory for tpu_custom_call.1']
    #allocation10 [shape = 'u8[32768]{0}', space=vmem, size = 0x8000, scoped, tag = 'output window, operand 0, single buffered']
    %10 = vsyncpa [#allocation3], 0
    %11 = vsyncpa [#allocation6], 0
    %12 = vsyncpa [#allocation9], 0
    %13 = vsyncpa [#allocation4], 0
    // Predicated region
    $region2: #{tpu_custom_call.1} parent=1 // pred_check
      _
    $region3: #{tpu_custom_call.1} parent=1 // pred_check_branch
      %15 = sbr.rel (0) target = $region5
    $region4: #{tpu_custom_call.1} parent=1 // pred_region
      %s17 = ssub.s32 512, 512
      %18 = vsyncadd [#allocation3], %s17
      %s20 = sshll.u32 [#allocation2], 4
      %s21 = int_to_ptr.vmem [resolvable:$true] %s20
      %23 = dma.hbm_to_vmem [thread:$0]  %s0, 512, %s21, [#allocation3]
    $region5: #{tpu_custom_call.1} parent=1 // pred_fallthru
      _
    // Predicated region
    $region6: #{tpu_custom_call.1} parent=1 // pred_check
      _
    $region7: #{tpu_custom_call.1} parent=1 // pred_check_branch
      %25 = sbr.rel (0) target = $region9
    $region8: #{tpu_custom_call.1} parent=1 // pred_region
      %s27 = ssub.s32 8192, 8192
      %28 = vsyncadd [#allocation6], %s27
      %s29 = sshll.u32 [#allocation5], 4
      %s30 = int_to_ptr.vmem [resolvable:$true] %s29
      %35 = dma.hbm_to_vmem [thread:$0]  %s1, 8192, %s30, [#allocation6], 64, 64, 4
    $region9: #{tpu_custom_call.1} parent=1 // pred_fallthru
      _
    // Predicated region
    $region10: #{tpu_custom_call.1} parent=1 // pred_check
      _
    $region11: #{tpu_custom_call.1} parent=1 // pred_check_branch
      %37 = sbr.rel (0) target = $region13
    $region12: #{tpu_custom_call.1} parent=1 // pred_region
      _
    $region13: #{tpu_custom_call.1} parent=1 // pred_fallthru
      _
    // Predicated region
    $region14: #{tpu_custom_call.1} parent=1 // pred_check
      _
    $region15: #{tpu_custom_call.1} parent=1 // pred_check_branch
      %39 = sbr.rel (0) target = $region17
    $region16: #{tpu_custom_call.1} parent=1 // pred_region
      %s41 = ssub.s32 8192, 8192
      %42 = vsyncadd [#allocation6], %s41
      %s43 = sshll.u32 [#allocation7], 4
      %s44 = int_to_ptr.vmem [resolvable:$true] %s43
      %49 = dma.hbm_to_vmem [thread:$0]  %s3, 8192, %s44, [#allocation6], 512, 512, 32
    $region17: #{tpu_custom_call.1} parent=1 // pred_fallthru
      _
    // Predicated region
    $region18: #{tpu_custom_call.1} parent=1 // pred_check
      _
    $region19: #{tpu_custom_call.1} parent=1 // pred_check_branch
      %51 = sbr.rel (0) target = $region21
    $region20: #{tpu_custom_call.1} parent=1 // pred_region
      %s53 = ssub.s32 128, 128
      %54 = vsyncadd [#allocation9], %s53
      %s56 = sshll.u32 [#allocation8], 4
      %s57 = int_to_ptr.vmem [resolvable:$true] %s56
      %59 = dma.hbm_to_vmem [thread:$0]  %s4, 128, %s57, [#allocation9]
    $region21: #{tpu_custom_call.1} parent=1 // pred_fallthru
      _
    // Predicated region
    $region22: #{tpu_custom_call.1} parent=1 // pred_check
      _
    $region23: #{tpu_custom_call.1} parent=1 // pred_check_branch
      %61 = sbr.rel (0) target = $region25
    $region24: #{tpu_custom_call.1} parent=1 // pred_region
      %62 = dma.done [#allocation3], 512
    $region25: #{tpu_custom_call.1} parent=1 // pred_fallthru
      _
    // Predicated region
    $region26: #{tpu_custom_call.1} parent=1 // pred_check
      _
    $region27: #{tpu_custom_call.1} parent=1 // pred_check_branch
      %64 = sbr.rel (0) target = $region29
    $region28: #{tpu_custom_call.1} parent=1 // pred_region
      %65 = dma.done [#allocation6], 8192
    $region29: #{tpu_custom_call.1} parent=1 // pred_fallthru
      _
    // Predicated region
    $region30: #{tpu_custom_call.1} parent=1 // pred_check
      _
    $region31: #{tpu_custom_call.1} parent=1 // pred_check_branch
      %67 = sbr.rel (0) target = $region33
    $region32: #{tpu_custom_call.1} parent=1 // pred_region
      %68 = dma.done [#allocation6], 8192
    $region33: #{tpu_custom_call.1} parent=1 // pred_fallthru
      _
    // Predicated region
    $region34: #{tpu_custom_call.1} parent=1 // pred_check
      _
    $region35: #{tpu_custom_call.1} parent=1 // pred_check_branch
      %70 = sbr.rel (0) target = $region37
    $region36: #{tpu_custom_call.1} parent=1 // pred_region
      %71 = dma.done [#allocation9], 128
    $region37: #{tpu_custom_call.1} parent=1 // pred_fallthru
      _
    %v73 = vld [vmem:[#allocation2] sm:$0xff]
    %v74 = vld [vmem:[#allocation2 + $0x8] sm:$0xff]
    %v75 = vld [vmem:[#allocation2 + $0x10] sm:$0xff]
    %v76 = vld [vmem:[#allocation2 + $0x18] sm:$0xff]
    %v77 = vld [vmem:[#allocation5] sm:$0xf]
    %v78 = vld [vmem:[#allocation5 + $0x4] sm:$0xf]
    %v79 = vld [vmem:[#allocation5 + $0x8] sm:$0xf]
    %v80 = vld [vmem:[#allocation5 + $0xc] sm:$0xf]
    %v81 = vld [vmem:[#allocation5 + $0x10] sm:$0xf]
    %v82 = vld [vmem:[#allocation5 + $0x14] sm:$0xf]
    %v83 = vld [vmem:[#allocation5 + $0x18] sm:$0xf]
    %v84 = vld [vmem:[#allocation5 + $0x1c] sm:$0xf]
    %v85 = vld [vmem:[#allocation5 + $0x20] sm:$0xf]
    %v86 = vld [vmem:[#allocation5 + $0x24] sm:$0xf]
    %v87 = vld [vmem:[#allocation5 + $0x28] sm:$0xf]
    %v88 = vld [vmem:[#allocation5 + $0x2c] sm:$0xf]
    %v89 = vld [vmem:[#allocation5 + $0x30] sm:$0xf]
    %v90 = vld [vmem:[#allocation5 + $0x34] sm:$0xf]
    %v91 = vld [vmem:[#allocation5 + $0x38] sm:$0xf]
    %v92 = vld [vmem:[#allocation5 + $0x3c] sm:$0xf]
    %v93 = vld [vmem:[#allocation5 + $0x40] sm:$0xf]
    %v94 = vld [vmem:[#allocation5 + $0x44] sm:$0xf]
    %v95 = vld [vmem:[#allocation5 + $0x48] sm:$0xf]
    %v96 = vld [vmem:[#allocation5 + $0x4c] sm:$0xf]
    %v97 = vld [vmem:[#allocation5 + $0x50] sm:$0xf]
    %v98 = vld [vmem:[#allocation5 + $0x54] sm:$0xf]
    %v99 = vld [vmem:[#allocation5 + $0x58] sm:$0xf]
    %v100 = vld [vmem:[#allocation5 + $0x5c] sm:$0xf]
    %v101 = vld [vmem:[#allocation5 + $0x60] sm:$0xf]
    %v102 = vld [vmem:[#allocation5 + $0x64] sm:$0xf]
    %v103 = vld [vmem:[#allocation5 + $0x68] sm:$0xf]
    %v104 = vld [vmem:[#allocation5 + $0x6c] sm:$0xf]
    %v105 = vld [vmem:[#allocation5 + $0x70] sm:$0xf]
    %v106 = vld [vmem:[#allocation5 + $0x74] sm:$0xf]
    %v107 = vld [vmem:[#allocation5 + $0x78] sm:$0xf]
    %v108 = vld [vmem:[#allocation5 + $0x7c] sm:$0xf]
    %v109 = vld [vmem:[#allocation5 + $0x80] sm:$0xf]
    %v110 = vld [vmem:[#allocation5 + $0x84] sm:$0xf]
    %v111 = vld [vmem:[#allocation5 + $0x88] sm:$0xf]
    %v112 = vld [vmem:[#allocation5 + $0x8c] sm:$0xf]
    %v113 = vld [vmem:[#allocation5 + $0x90] sm:$0xf]
    %v114 = vld [vmem:[#allocation5 + $0x94] sm:$0xf]
    %v115 = vld [vmem:[#allocation5 + $0x98] sm:$0xf]
    %v116 = vld [vmem:[#allocation5 + $0x9c] sm:$0xf]
    %v117 = vld [vmem:[#allocation5 + $0xa0] sm:$0xf]
    %v118 = vld [vmem:[#allocation5 + $0xa4] sm:$0xf]
    %v119 = vld [vmem:[#allocation5 + $0xa8] sm:$0xf]
    %v120 = vld [vmem:[#allocation5 + $0xac] sm:$0xf]
    %v121 = vld [vmem:[#allocation5 + $0xb0] sm:$0xf]
    %v122 = vld [vmem:[#allocation5 + $0xb4] sm:$0xf]
    %v123 = vld [vmem:[#allocation5 + $0xb8] sm:$0xf]
    %v124 = vld [vmem:[#allocation5 + $0xbc] sm:$0xf]
    %v125 = vld [vmem:[#allocation5 + $0xc0] sm:$0xf]
    %v126 = vld [vmem:[#allocation5 + $0xc4] sm:$0xf]
    %v127 = vld [vmem:[#allocation5 + $0xc8] sm:$0xf]
    %v128 = vld [vmem:[#allocation5 + $0xcc] sm:$0xf]
    %v129 = vld [vmem:[#allocation5 + $0xd0] sm:$0xf]
    %v130 = vld [vmem:[#allocation5 + $0xd4] sm:$0xf]
    %v131 = vld [vmem:[#allocation5 + $0xd8] sm:$0xf]
    %v132 = vld [vmem:[#allocation5 + $0xdc] sm:$0xf]
    %v133 = vld [vmem:[#allocation5 + $0xe0] sm:$0xf]
    %v134 = vld [vmem:[#allocation5 + $0xe4] sm:$0xf]
    %v135 = vld [vmem:[#allocation5 + $0xe8] sm:$0xf]
    %v136 = vld [vmem:[#allocation5 + $0xec] sm:$0xf]
    %v137 = vld [vmem:[#allocation5 + $0xf0] sm:$0xf]
    %v138 = vld [vmem:[#allocation5 + $0xf4] sm:$0xf]
    %v139 = vld [vmem:[#allocation5 + $0xf8] sm:$0xf]
    %v140 = vld [vmem:[#allocation5 + $0xfc] sm:$0xf]
    %v141 = vld [vmem:[#allocation5 + $0x100] sm:$0xf]
    %v142 = vld [vmem:[#allocation5 + $0x104] sm:$0xf]
    %v143 = vld [vmem:[#allocation5 + $0x108] sm:$0xf]
    %v144 = vld [vmem:[#allocation5 + $0x10c] sm:$0xf]
    %v145 = vld [vmem:[#allocation5 + $0x110] sm:$0xf]
    %v146 = vld [vmem:[#allocation5 + $0x114] sm:$0xf]
    %v147 = vld [vmem:[#allocation5 + $0x118] sm:$0xf]
    %v148 = vld [vmem:[#allocation5 + $0x11c] sm:$0xf]
    %v149 = vld [vmem:[#allocation5 + $0x120] sm:$0xf]
    %v150 = vld [vmem:[#allocation5 + $0x124] sm:$0xf]
    %v151 = vld [vmem:[#allocation5 + $0x128] sm:$0xf]
    %v152 = vld [vmem:[#allocation5 + $0x12c] sm:$0xf]
    %v153 = vld [vmem:[#allocation5 + $0x130] sm:$0xf]
    %v154 = vld [vmem:[#allocation5 + $0x134] sm:$0xf]
    %v155 = vld [vmem:[#allocation5 + $0x138] sm:$0xf]
    %v156 = vld [vmem:[#allocation5 + $0x13c] sm:$0xf]
    %v157 = vld [vmem:[#allocation5 + $0x140] sm:$0xf]
    %v158 = vld [vmem:[#allocation5 + $0x144] sm:$0xf]
    %v159 = vld [vmem:[#allocation5 + $0x148] sm:$0xf]
    %v160 = vld [vmem:[#allocation5 + $0x14c] sm:$0xf]
    %v161 = vld [vmem:[#allocation5 + $0x150] sm:$0xf]
    %v162 = vld [vmem:[#allocation5 + $0x154] sm:$0xf]
    %v163 = vld [vmem:[#allocation5 + $0x158] sm:$0xf]
    %v164 = vld [vmem:[#allocation5 + $0x15c] sm:$0xf]
    %v165 = vld [vmem:[#allocation5 + $0x160] sm:$0xf]
    %v166 = vld [vmem:[#allocation5 + $0x164] sm:$0xf]
    %v167 = vld [vmem:[#allocation5 + $0x168] sm:$0xf]
    %v168 = vld [vmem:[#allocation5 + $0x16c] sm:$0xf]
    %v169 = vld [vmem:[#allocation5 + $0x170] sm:$0xf]
    %v170 = vld [vmem:[#allocation5 + $0x174] sm:$0xf]
    %v171 = vld [vmem:[#allocation5 + $0x178] sm:$0xf]
    %v172 = vld [vmem:[#allocation5 + $0x17c] sm:$0xf]
    %v173 = vld [vmem:[#allocation5 + $0x180] sm:$0xf]
    %v174 = vld [vmem:[#allocation5 + $0x184] sm:$0xf]
    %v175 = vld [vmem:[#allocation5 + $0x188] sm:$0xf]
    %v176 = vld [vmem:[#allocation5 + $0x18c] sm:$0xf]
    %v177 = vld [vmem:[#allocation5 + $0x190] sm:$0xf]
    %v178 = vld [vmem:[#allocation5 + $0x194] sm:$0xf]
    %v179 = vld [vmem:[#allocation5 + $0x198] sm:$0xf]
    %v180 = vld [vmem:[#allocation5 + $0x19c] sm:$0xf]
    %v181 = vld [vmem:[#allocation5 + $0x1a0] sm:$0xf]
    %v182 = vld [vmem:[#allocation5 + $0x1a4] sm:$0xf]
    %v183 = vld [vmem:[#allocation5 + $0x1a8] sm:$0xf]
    %v184 = vld [vmem:[#allocation5 + $0x1ac] sm:$0xf]
    %v185 = vld [vmem:[#allocation5 + $0x1b0] sm:$0xf]
    %v186 = vld [vmem:[#allocation5 + $0x1b4] sm:$0xf]
    %v187 = vld [vmem:[#allocation5 + $0x1b8] sm:$0xf]
    %v188 = vld [vmem:[#allocation5 + $0x1bc] sm:$0xf]
    %v189 = vld [vmem:[#allocation5 + $0x1c0] sm:$0xf]
    %v190 = vld [vmem:[#allocation5 + $0x1c4] sm:$0xf]
    %v191 = vld [vmem:[#allocation5 + $0x1c8] sm:$0xf]
    %v192 = vld [vmem:[#allocation5 + $0x1cc] sm:$0xf]
    %v193 = vld [vmem:[#allocation5 + $0x1d0] sm:$0xf]
    %v194 = vld [vmem:[#allocation5 + $0x1d4] sm:$0xf]
    %v195 = vld [vmem:[#allocation5 + $0x1d8] sm:$0xf]
    %v196 = vld [vmem:[#allocation5 + $0x1dc] sm:$0xf]
    %v197 = vld [vmem:[#allocation5 + $0x1e0] sm:$0xf]
    %v198 = vld [vmem:[#allocation5 + $0x1e4] sm:$0xf]
    %v199 = vld [vmem:[#allocation5 + $0x1e8] sm:$0xf]
    %v200 = vld [vmem:[#allocation5 + $0x1ec] sm:$0xf]
    %v201 = vld [vmem:[#allocation5 + $0x1f0] sm:$0xf]
    %v202 = vld [vmem:[#allocation5 + $0x1f4] sm:$0xf]
    %v203 = vld [vmem:[#allocation5 + $0x1f8] sm:$0xf]
    %v204 = vld [vmem:[#allocation5 + $0x1fc] sm:$0xf]
    %v205 = vld [vmem:[%s2] sm:$0x1]
    %v207 = vlaneseq
    %v208 = vshrl.u32 %v207, 7
    %v209 = vsub.s32 0, %v208
    %v210 = vrot.slane %v205, %v209
    %v216 = vunpack.c.l.b16 %v73
    %v217 = vunpack.c.h.b16 %v73
    %v218 = vunpack.c.l.b16 %v74
    %v219 = vunpack.c.h.b16 %v74
    %v220 = vunpack.c.l.b16 %v75
    %v221 = vunpack.c.h.b16 %v75
    %v222 = vunpack.c.l.b16 %v76
    %v223 = vunpack.c.h.b16 %v76
    %v224 = vpack.c.b16 %v216, %v216
    %v225 = vpack.c.b16 %v217, %v217
    %v226 = vpack.c.b16 %v218, %v218
    %v227 = vpack.c.b16 %v219, %v219
    %v228 = vpack.c.b16 %v220, %v220
    %v229 = vpack.c.b16 %v221, %v221
    %v230 = vpack.c.b16 %v222, %v222
    %v231 = vpack.c.b16 %v223, %v223
    %v368 = vunpack.c.l.b16 %v77
    %v369 = vunpack.c.l.b16 %v78
    %v370 = vunpack.c.l.b16 %v79
    %v371 = vunpack.c.l.b16 %v80
    %v372 = vunpack.c.l.b16 %v81
    %v373 = vunpack.c.l.b16 %v82
    %v374 = vunpack.c.l.b16 %v83
    %v375 = vunpack.c.l.b16 %v84
    %v376 = vunpack.c.l.b16 %v85
    %v377 = vunpack.c.l.b16 %v86
    %v378 = vunpack.c.l.b16 %v87
    %v379 = vunpack.c.l.b16 %v88
    %v380 = vunpack.c.l.b16 %v89
    %v381 = vunpack.c.l.b16 %v90
    %v382 = vunpack.c.l.b16 %v91
    %v383 = vunpack.c.l.b16 %v92
    %v384 = vunpack.c.l.b16 %v93
    %v385 = vunpack.c.l.b16 %v94
    %v386 = vunpack.c.l.b16 %v95
    %v387 = vunpack.c.l.b16 %v96
    %v388 = vunpack.c.l.b16 %v97
    %v389 = vunpack.c.l.b16 %v98
    %v390 = vunpack.c.l.b16 %v99
    %v391 = vunpack.c.l.b16 %v100
    %v392 = vunpack.c.l.b16 %v101
    %v393 = vunpack.c.l.b16 %v102
    %v394 = vunpack.c.l.b16 %v103
    %v395 = vunpack.c.l.b16 %v104
    %v396 = vunpack.c.l.b16 %v105
    %v397 = vunpack.c.l.b16 %v106
    %v398 = vunpack.c.l.b16 %v107
    %v399 = vunpack.c.l.b16 %v108
    %v400 = vunpack.c.l.b16 %v109
    %v401 = vunpack.c.l.b16 %v110
    %v402 = vunpack.c.l.b16 %v111
    %v403 = vunpack.c.l.b16 %v112
    %v404 = vunpack.c.l.b16 %v113
    %v405 = vunpack.c.l.b16 %v114
    %v406 = vunpack.c.l.b16 %v115
    %v407 = vunpack.c.l.b16 %v116
    %v408 = vunpack.c.l.b16 %v117
    %v409 = vunpack.c.l.b16 %v118
    %v410 = vunpack.c.l.b16 %v119
    %v411 = vunpack.c.l.b16 %v120
    %v412 = vunpack.c.l.b16 %v121
    %v413 = vunpack.c.l.b16 %v122
    %v414 = vunpack.c.l.b16 %v123
    %v415 = vunpack.c.l.b16 %v124
    %v416 = vunpack.c.l.b16 %v125
    %v417 = vunpack.c.l.b16 %v126
    %v418 = vunpack.c.l.b16 %v127
    %v419 = vunpack.c.l.b16 %v128
    %v420 = vunpack.c.l.b16 %v129
    %v421 = vunpack.c.l.b16 %v130
    %v422 = vunpack.c.l.b16 %v131
    %v423 = vunpack.c.l.b16 %v132
    %v424 = vunpack.c.l.b16 %v133
    %v425 = vunpack.c.l.b16 %v134
    %v426 = vunpack.c.l.b16 %v135
    %v427 = vunpack.c.l.b16 %v136
    %v428 = vunpack.c.l.b16 %v137
    %v429 = vunpack.c.l.b16 %v138
    %v430 = vunpack.c.l.b16 %v139
    %v431 = vunpack.c.l.b16 %v140
    %v432 = vunpack.c.l.b16 %v141
    %v433 = vunpack.c.l.b16 %v142
    %v434 = vunpack.c.l.b16 %v143
    %v435 = vunpack.c.l.b16 %v144
    %v436 = vunpack.c.l.b16 %v145
    %v437 = vunpack.c.l.b16 %v146
    %v438 = vunpack.c.l.b16 %v147
    %v439 = vunpack.c.l.b16 %v148
    %v440 = vunpack.c.l.b16 %v149
    %v441 = vunpack.c.l.b16 %v150
    %v442 = vunpack.c.l.b16 %v151
    %v443 = vunpack.c.l.b16 %v152
    %v444 = vunpack.c.l.b16 %v153
    %v445 = vunpack.c.l.b16 %v154
    %v446 = vunpack.c.l.b16 %v155
    %v447 = vunpack.c.l.b16 %v156
    %v448 = vunpack.c.l.b16 %v157
    %v449 = vunpack.c.l.b16 %v158
    %v450 = vunpack.c.l.b16 %v159
    %v451 = vunpack.c.l.b16 %v160
    %v452 = vunpack.c.l.b16 %v161
    %v453 = vunpack.c.l.b16 %v162
    %v454 = vunpack.c.l.b16 %v163
    %v455 = vunpack.c.l.b16 %v164
    %v456 = vunpack.c.l.b16 %v165
    %v457 = vunpack.c.l.b16 %v166
    %v458 = vunpack.c.l.b16 %v167
    %v459 = vunpack.c.l.b16 %v168
    %v460 = vunpack.c.l.b16 %v169
    %v461 = vunpack.c.l.b16 %v170
    %v462 = vunpack.c.l.b16 %v171
    %v463 = vunpack.c.l.b16 %v172
    %v464 = vunpack.c.l.b16 %v173
    %v465 = vunpack.c.l.b16 %v174
    %v466 = vunpack.c.l.b16 %v175
    %v467 = vunpack.c.l.b16 %v176
    %v468 = vunpack.c.l.b16 %v177
    %v469 = vunpack.c.l.b16 %v178
    %v470 = vunpack.c.l.b16 %v179
    %v471 = vunpack.c.l.b16 %v180
    %v472 = vunpack.c.l.b16 %v181
    %v473 = vunpack.c.l.b16 %v182
    %v474 = vunpack.c.l.b16 %v183
    %v475 = vunpack.c.l.b16 %v184
    %v476 = vunpack.c.l.b16 %v185
    %v477 = vunpack.c.l.b16 %v186
    %v478 = vunpack.c.l.b16 %v187
    %v479 = vunpack.c.l.b16 %v188
    %v480 = vunpack.c.l.b16 %v189
    %v481 = vunpack.c.l.b16 %v190
    %v482 = vunpack.c.l.b16 %v191
    %v483 = vunpack.c.l.b16 %v192
    %v484 = vunpack.c.l.b16 %v193
    %v485 = vunpack.c.l.b16 %v194
    %v486 = vunpack.c.l.b16 %v195
    %v487 = vunpack.c.l.b16 %v196
    %v488 = vunpack.c.l.b16 %v197
    %v489 = vunpack.c.l.b16 %v198
    %v490 = vunpack.c.l.b16 %v199
    %v491 = vunpack.c.l.b16 %v200
    %v492 = vunpack.c.l.b16 %v201
    %v493 = vunpack.c.l.b16 %v202
    %v494 = vunpack.c.l.b16 %v203
    %v495 = vunpack.c.l.b16 %v204
    %v496 = vpack.c.b16 %v369, %v368
    %v497 = vpack.c.b16 %v371, %v370
    %v498 = vpack.c.b16 %v373, %v372
    %v499 = vpack.c.b16 %v375, %v374
    %v500 = vpack.c.b16 %v377, %v376
    %v501 = vpack.c.b16 %v379, %v378
    %v502 = vpack.c.b16 %v381, %v380
    %v503 = vpack.c.b16 %v383, %v382
    %v504 = vpack.c.b16 %v385, %v384
    %v505 = vpack.c.b16 %v387, %v386
    %v506 = vpack.c.b16 %v389, %v388
    %v507 = vpack.c.b16 %v391, %v390
    %v508 = vpack.c.b16 %v393, %v392
    %v509 = vpack.c.b16 %v395, %v394
    %v510 = vpack.c.b16 %v397, %v396
    %v511 = vpack.c.b16 %v399, %v398
    %v512 = vpack.c.b16 %v401, %v400
    %v513 = vpack.c.b16 %v403, %v402
    %v514 = vpack.c.b16 %v405, %v404
    %v515 = vpack.c.b16 %v407, %v406
    %v516 = vpack.c.b16 %v409, %v408
    %v517 = vpack.c.b16 %v411, %v410
    %v518 = vpack.c.b16 %v413, %v412
    %v519 = vpack.c.b16 %v415, %v414
    %v520 = vpack.c.b16 %v417, %v416
    %v521 = vpack.c.b16 %v419, %v418
    %v522 = vpack.c.b16 %v421, %v420
    %v523 = vpack.c.b16 %v423, %v422
    %v524 = vpack.c.b16 %v425, %v424
    %v525 = vpack.c.b16 %v427, %v426
    %v526 = vpack.c.b16 %v429, %v428
    %v527 = vpack.c.b16 %v431, %v430
    %v528 = vpack.c.b16 %v433, %v432
    %v529 = vpack.c.b16 %v435, %v434
    %v530 = vpack.c.b16 %v437, %v436
    %v531 = vpack.c.b16 %v439, %v438
    %v532 = vpack.c.b16 %v441, %v440
    %v533 = vpack.c.b16 %v443, %v442
    %v534 = vpack.c.b16 %v445, %v444
    %v535 = vpack.c.b16 %v447, %v446
    %v536 = vpack.c.b16 %v449, %v448
    %v537 = vpack.c.b16 %v451, %v450
    %v538 = vpack.c.b16 %v453, %v452
    %v539 = vpack.c.b16 %v455, %v454
    %v540 = vpack.c.b16 %v457, %v456
    %v541 = vpack.c.b16 %v459, %v458
    %v542 = vpack.c.b16 %v461, %v460
    %v543 = vpack.c.b16 %v463, %v462
    %v544 = vpack.c.b16 %v465, %v464
    %v545 = vpack.c.b16 %v467, %v466
    %v546 = vpack.c.b16 %v469, %v468
    %v547 = vpack.c.b16 %v471, %v470
    %v548 = vpack.c.b16 %v473, %v472
    %v549 = vpack.c.b16 %v475, %v474
    %v550 = vpack.c.b16 %v477, %v476
    %v551 = vpack.c.b16 %v479, %v478
    %v552 = vpack.c.b16 %v481, %v480
    %v553 = vpack.c.b16 %v483, %v482
    %v554 = vpack.c.b16 %v485, %v484
    %v555 = vpack.c.b16 %v487, %v486
    %v556 = vpack.c.b16 %v489, %v488
    %v557 = vpack.c.b16 %v491, %v490
    %v558 = vpack.c.b16 %v493, %v492
    %v559 = vpack.c.b16 %v495, %v494
    %624 = vmatprep.subr.bf16.mxu0 0
    %625 = vmatpush1.bf16.msra.mxu0 %v503
    %626 = vmatprep.subr.bf16.mxu0 0
    %627 = vmatpush1.bf16.msra.mxu0 %v502
    %628 = vmatprep.subr.bf16.mxu0 0
    %629 = vmatpush1.bf16.msra.mxu0 %v501
    %630 = vmatprep.subr.bf16.mxu0 0
    %631 = vmatpush1.bf16.msra.mxu0 %v500
    %632 = vmatprep.subr.bf16.mxu0 0
    %633 = vmatpush1.bf16.msra.mxu0 %v499
    %634 = vmatprep.subr.bf16.mxu0 0
    %635 = vmatpush1.bf16.msra.mxu0 %v498
    %636 = vmatprep.subr.bf16.mxu0 0
    %637 = vmatpush1.bf16.msra.mxu0 %v497
    %638 = vmatprep.subr.bf16.mxu0 0
    %639 = vmatpush1.bf16.msra.mxu0 %v496
    %640 = vmatprep.subr.bf16.mxu0 0
    %641 = vmatpush2.bf16.msra.mxu0 %v511
    %642 = vmatprep.subr.bf16.mxu0 0
    %643 = vmatpush2.bf16.msra.mxu0 %v510
    %644 = vmatprep.subr.bf16.mxu0 0
    %645 = vmatpush2.bf16.msra.mxu0 %v509
    %646 = vmatprep.subr.bf16.mxu0 0
    %647 = vmatpush2.bf16.msra.mxu0 %v508
    %648 = vmatprep.subr.bf16.mxu0 0
    %649 = vmatpush2.bf16.msra.mxu0 %v507
    %650 = vmatprep.subr.bf16.mxu0 0
    %651 = vmatpush2.bf16.msra.mxu0 %v506
    %652 = vmatprep.subr.bf16.mxu0 0
    %653 = vmatpush2.bf16.msra.mxu0 %v505
    %654 = vmatprep.subr.bf16.mxu0 0
    %655 = vmatpush2.bf16.msra.mxu0 %v504
    %656 = vmatprep.mubr.bf16.mxu0 %v225
    %657 = vmatmul.mubr.bf16.gmra.mxu0 %v224
    %v658 = vpop.f32.mrf.mxu0
    %v659 = vadd.f32 %v210, %v658
    %v660 = vpop.f32.mrf.mxu0
    %v661 = vpop.f32.mrf.mxu0
    %v662 = vpop.f32.mrf.mxu0
    %663 = vdwg.mxu0
    %664 = vmatprep.subr.bf16.mxu0 0
    %665 = vmatpush1.bf16.msra.mxu0 %v519
    %666 = vmatprep.subr.bf16.mxu0 0
    %667 = vmatpush1.bf16.msra.mxu0 %v518
    %668 = vmatprep.subr.bf16.mxu0 0
    %669 = vmatpush1.bf16.msra.mxu0 %v517
    %670 = vmatprep.subr.bf16.mxu0 0
    %671 = vmatpush1.bf16.msra.mxu0 %v516
    %672 = vmatprep.subr.bf16.mxu0 0
    %673 = vmatpush1.bf16.msra.mxu0 %v515
    %674 = vmatprep.subr.bf16.mxu0 0
    %675 = vmatpush1.bf16.msra.mxu0 %v514
    %676 = vmatprep.subr.bf16.mxu0 0
    %677 = vmatpush1.bf16.msra.mxu0 %v513
    %678 = vmatprep.subr.bf16.mxu0 0
    %679 = vmatpush1.bf16.msra.mxu0 %v512
    %680 = vmatprep.subr.bf16.mxu0 0
    %681 = vmatpush2.bf16.msra.mxu0 %v527
    %682 = vmatprep.subr.bf16.mxu0 0
    %683 = vmatpush2.bf16.msra.mxu0 %v526
    %684 = vmatprep.subr.bf16.mxu0 0
    %685 = vmatpush2.bf16.msra.mxu0 %v525
    %686 = vmatprep.subr.bf16.mxu0 0
    %687 = vmatpush2.bf16.msra.mxu0 %v524
    %688 = vmatprep.subr.bf16.mxu0 0
    %689 = vmatpush2.bf16.msra.mxu0 %v523
    %690 = vmatprep.subr.bf16.mxu0 0
    %691 = vmatpush2.bf16.msra.mxu0 %v522
    %692 = vmatprep.subr.bf16.mxu0 0
    %693 = vmatpush2.bf16.msra.mxu0 %v521
    %694 = vmatprep.subr.bf16.mxu0 0
    %695 = vmatpush2.bf16.msra.mxu0 %v520
    %696 = vmatprep.mubr.bf16.mxu0 %v227
    %697 = vmatmul.mubr.bf16.gmra.mxu0 %v226
    %v698 = vpop.f32.mrf.mxu0
    %v699 = vadd.f32 %v659, %v698
    %v700 = vpop.f32.mrf.mxu0
    %v701 = vpop.f32.mrf.mxu0
    %v702 = vpop.f32.mrf.mxu0
    %703 = vdwg.mxu0
    %704 = vmatprep.subr.bf16.mxu0 0
    %705 = vmatpush1.bf16.msra.mxu0 %v535
    %706 = vmatprep.subr.bf16.mxu0 0
    %707 = vmatpush1.bf16.msra.mxu0 %v534
    %708 = vmatprep.subr.bf16.mxu0 0
    %709 = vmatpush1.bf16.msra.mxu0 %v533
    %710 = vmatprep.subr.bf16.mxu0 0
    %711 = vmatpush1.bf16.msra.mxu0 %v532
    %712 = vmatprep.subr.bf16.mxu0 0
    %713 = vmatpush1.bf16.msra.mxu0 %v531
    %714 = vmatprep.subr.bf16.mxu0 0
    %715 = vmatpush1.bf16.msra.mxu0 %v530
    %716 = vmatprep.subr.bf16.mxu0 0
    %717 = vmatpush1.bf16.msra.mxu0 %v529
    %718 = vmatprep.subr.bf16.mxu0 0
    %719 = vmatpush1.bf16.msra.mxu0 %v528
    %720 = vmatprep.subr.bf16.mxu0 0
    %721 = vmatpush2.bf16.msra.mxu0 %v543
    %722 = vmatprep.subr.bf16.mxu0 0
    %723 = vmatpush2.bf16.msra.mxu0 %v542
    %724 = vmatprep.subr.bf16.mxu0 0
    %725 = vmatpush2.bf16.msra.mxu0 %v541
    %726 = vmatprep.subr.bf16.mxu0 0
    %727 = vmatpush2.bf16.msra.mxu0 %v540
    %728 = vmatprep.subr.bf16.mxu0 0
    %729 = vmatpush2.bf16.msra.mxu0 %v539
    %730 = vmatprep.subr.bf16.mxu0 0
    %731 = vmatpush2.bf16.msra.mxu0 %v538
    %732 = vmatprep.subr.bf16.mxu0 0
    %733 = vmatpush2.bf16.msra.mxu0 %v537
    %734 = vmatprep.subr.bf16.mxu0 0
    %735 = vmatpush2.bf16.msra.mxu0 %v536
    %736 = vmatprep.mubr.bf16.mxu0 %v229
    %737 = vmatmul.mubr.bf16.gmra.mxu0 %v228
    %v738 = vpop.f32.mrf.mxu0
    %v739 = vadd.f32 %v699, %v738
    %v740 = vpop.f32.mrf.mxu0
    %v741 = vpop.f32.mrf.mxu0
    %v742 = vpop.f32.mrf.mxu0
    %743 = vdwg.mxu0
    %744 = vmatprep.subr.bf16.mxu0 0
    %745 = vmatpush1.bf16.msra.mxu0 %v551
    %746 = vmatprep.subr.bf16.mxu0 0
    %747 = vmatpush1.bf16.msra.mxu0 %v550
    %748 = vmatprep.subr.bf16.mxu0 0
    %749 = vmatpush1.bf16.msra.mxu0 %v549
    %750 = vmatprep.subr.bf16.mxu0 0
    %751 = vmatpush1.bf16.msra.mxu0 %v548
    %752 = vmatprep.subr.bf16.mxu0 0
    %753 = vmatpush1.bf16.msra.mxu0 %v547
    %754 = vmatprep.subr.bf16.mxu0 0
    %755 = vmatpush1.bf16.msra.mxu0 %v546
    %756 = vmatprep.subr.bf16.mxu0 0
    %757 = vmatpush1.bf16.msra.mxu0 %v545
    %758 = vmatprep.subr.bf16.mxu0 0
    %759 = vmatpush1.bf16.msra.mxu0 %v544
    %760 = vmatprep.subr.bf16.mxu0 0
    %761 = vmatpush2.bf16.msra.mxu0 %v559
    %762 = vmatprep.subr.bf16.mxu0 0
    %763 = vmatpush2.bf16.msra.mxu0 %v558
    %764 = vmatprep.subr.bf16.mxu0 0
    %765 = vmatpush2.bf16.msra.mxu0 %v557
    %766 = vmatprep.subr.bf16.mxu0 0
    %767 = vmatpush2.bf16.msra.mxu0 %v556
    %768 = vmatprep.subr.bf16.mxu0 0
    %769 = vmatpush2.bf16.msra.mxu0 %v555
    %770 = vmatprep.subr.bf16.mxu0 0
    %771 = vmatpush2.bf16.msra.mxu0 %v554
    %772 = vmatprep.subr.bf16.mxu0 0
    %773 = vmatpush2.bf16.msra.mxu0 %v553
    %774 = vmatprep.subr.bf16.mxu0 0
    %775 = vmatpush2.bf16.msra.mxu0 %v552
    %776 = vmatprep.mubr.bf16.mxu0 %v231
    %777 = vmatmul.mubr.bf16.gmra.mxu0 %v230
    %v778 = vpop.f32.mrf.mxu0
    %v779 = vadd.f32 %v739, %v778
    %v780 = vpop.f32.mrf.mxu0
    %v781 = vpop.f32.mrf.mxu0
    %v782 = vpop.f32.mrf.mxu0
    %783 = vdwg.mxu0
    %v784 = vmax.f32 %v779, 0.0
    %v785 = vpack.c.bf16 %v784, %v784
    %v786 = vld [vmem:[#allocation7] sm:$0xff]
    %v787 = vld [vmem:[#allocation7 + $0x8] sm:$0xff]
    %v788 = vld [vmem:[#allocation7 + $0x10] sm:$0xff]
    %v789 = vld [vmem:[#allocation7 + $0x18] sm:$0xff]
    %v790 = vld [vmem:[#allocation7 + $0x20] sm:$0xff]
    %v791 = vld [vmem:[#allocation7 + $0x28] sm:$0xff]
    %v792 = vld [vmem:[#allocation7 + $0x30] sm:$0xff]
    %v793 = vld [vmem:[#allocation7 + $0x38] sm:$0xff]
    %v794 = vld [vmem:[#allocation7 + $0x40] sm:$0xff]
    %v795 = vld [vmem:[#allocation7 + $0x48] sm:$0xff]
    %v796 = vld [vmem:[#allocation7 + $0x50] sm:$0xff]
    %v797 = vld [vmem:[#allocation7 + $0x58] sm:$0xff]
    %v798 = vld [vmem:[#allocation7 + $0x60] sm:$0xff]
    %v799 = vld [vmem:[#allocation7 + $0x68] sm:$0xff]
    %v800 = vld [vmem:[#allocation7 + $0x70] sm:$0xff]
    %v801 = vld [vmem:[#allocation7 + $0x78] sm:$0xff]
    %v802 = vld [vmem:[#allocation7 + $0x80] sm:$0xff]
    %v803 = vld [vmem:[#allocation7 + $0x88] sm:$0xff]
    %v804 = vld [vmem:[#allocation7 + $0x90] sm:$0xff]
    %v805 = vld [vmem:[#allocation7 + $0x98] sm:$0xff]
    %v806 = vld [vmem:[#allocation7 + $0xa0] sm:$0xff]
    %v807 = vld [vmem:[#allocation7 + $0xa8] sm:$0xff]
    %v808 = vld [vmem:[#allocation7 + $0xb0] sm:$0xff]
    %v809 = vld [vmem:[#allocation7 + $0xb8] sm:$0xff]
    %v810 = vld [vmem:[#allocation7 + $0xc0] sm:$0xff]
    %v811 = vld [vmem:[#allocation7 + $0xc8] sm:$0xff]
    %v812 = vld [vmem:[#allocation7 + $0xd0] sm:$0xff]
    %v813 = vld [vmem:[#allocation7 + $0xd8] sm:$0xff]
    %v814 = vld [vmem:[#allocation7 + $0xe0] sm:$0xff]
    %v815 = vld [vmem:[#allocation7 + $0xe8] sm:$0xff]
    %v816 = vld [vmem:[#allocation7 + $0xf0] sm:$0xff]
    %v817 = vld [vmem:[#allocation7 + $0xf8] sm:$0xff]
    %v818 = vld [vmem:[#allocation7 + $0x100] sm:$0xff]
    %v819 = vld [vmem:[#allocation7 + $0x108] sm:$0xff]
    %v820 = vld [vmem:[#allocation7 + $0x110] sm:$0xff]
    %v821 = vld [vmem:[#allocation7 + $0x118] sm:$0xff]
    %v822 = vld [vmem:[#allocation7 + $0x120] sm:$0xff]
    %v823 = vld [vmem:[#allocation7 + $0x128] sm:$0xff]
    %v824 = vld [vmem:[#allocation7 + $0x130] sm:$0xff]
    %v825 = vld [vmem:[#allocation7 + $0x138] sm:$0xff]
    %v826 = vld [vmem:[#allocation7 + $0x140] sm:$0xff]
    %v827 = vld [vmem:[#allocation7 + $0x148] sm:$0xff]
    %v828 = vld [vmem:[#allocation7 + $0x150] sm:$0xff]
    %v829 = vld [vmem:[#allocation7 + $0x158] sm:$0xff]
    %v830 = vld [vmem:[#allocation7 + $0x160] sm:$0xff]
    %v831 = vld [vmem:[#allocation7 + $0x168] sm:$0xff]
    %v832 = vld [vmem:[#allocation7 + $0x170] sm:$0xff]
    %v833 = vld [vmem:[#allocation7 + $0x178] sm:$0xff]
    %v834 = vld [vmem:[#allocation7 + $0x180] sm:$0xff]
    %v835 = vld [vmem:[#allocation7 + $0x188] sm:$0xff]
    %v836 = vld [vmem:[#allocation7 + $0x190] sm:$0xff]
    %v837 = vld [vmem:[#allocation7 + $0x198] sm:$0xff]
    %v838 = vld [vmem:[#allocation7 + $0x1a0] sm:$0xff]
    %v839 = vld [vmem:[#allocation7 + $0x1a8] sm:$0xff]
    %v840 = vld [vmem:[#allocation7 + $0x1b0] sm:$0xff]
    %v841 = vld [vmem:[#allocation7 + $0x1b8] sm:$0xff]
    %v842 = vld [vmem:[#allocation7 + $0x1c0] sm:$0xff]
    %v843 = vld [vmem:[#allocation7 + $0x1c8] sm:$0xff]
    %v844 = vld [vmem:[#allocation7 + $0x1d0] sm:$0xff]
    %v845 = vld [vmem:[#allocation7 + $0x1d8] sm:$0xff]
    %v846 = vld [vmem:[#allocation7 + $0x1e0] sm:$0xff]
    %v847 = vld [vmem:[#allocation7 + $0x1e8] sm:$0xff]
    %v848 = vld [vmem:[#allocation7 + $0x1f0] sm:$0xff]
    %v849 = vld [vmem:[#allocation7 + $0x1f8] sm:$0xff]
    %v850 = vld [vmem:[#allocation8] sm:$0xff]
    %v852 = vlaneseq
    %v853 = vshrl.u32 %v852, 7
    %v854 = vsub.s32 0, %v853
    %v855 = vrot.slane %v850, %v854
    %v856 = vlaneseq
    %v857 = vshrl.u32 %v856, 7
    %v858 = vsub.s32 1, %v857
    %v859 = vrot.slane %v850, %v858
    %v860 = vlaneseq
    %v861 = vshrl.u32 %v860, 7
    %v862 = vsub.s32 2, %v861
    %v863 = vrot.slane %v850, %v862
    %v864 = vlaneseq
    %v865 = vshrl.u32 %v864, 7
    %v866 = vsub.s32 3, %v865
    %v867 = vrot.slane %v850, %v866
    %v868 = vlaneseq
    %v869 = vshrl.u32 %v868, 7
    %v870 = vsub.s32 4, %v869
    %v871 = vrot.slane %v850, %v870
    %v872 = vlaneseq
    %v873 = vshrl.u32 %v872, 7
    %v874 = vsub.s32 5, %v873
    %v875 = vrot.slane %v850, %v874
    %v876 = vlaneseq
    %v877 = vshrl.u32 %v876, 7
    %v878 = vsub.s32 6, %v877
    %v879 = vrot.slane %v850, %v878
    %v880 = vlaneseq
    %v881 = vshrl.u32 %v880, 7
    %v882 = vsub.s32 7, %v881
    %v883 = vrot.slane %v850, %v882
    %v956 = vunpack.c.l.b16 %v786
    %v957 = vunpack.c.h.b16 %v786
    %v958 = vunpack.c.l.b16 %v787
    %v959 = vunpack.c.h.b16 %v787
    %v960 = vunpack.c.l.b16 %v788
    %v961 = vunpack.c.h.b16 %v788
    %v962 = vunpack.c.l.b16 %v789
    %v963 = vunpack.c.h.b16 %v789
    %v964 = vunpack.c.l.b16 %v790
    %v965 = vunpack.c.h.b16 %v790
    %v966 = vunpack.c.l.b16 %v791
    %v967 = vunpack.c.h.b16 %v791
    %v968 = vunpack.c.l.b16 %v792
    %v969 = vunpack.c.h.b16 %v792
    %v970 = vunpack.c.l.b16 %v793
    %v971 = vunpack.c.h.b16 %v793
    %v972 = vunpack.c.l.b16 %v794
    %v973 = vunpack.c.h.b16 %v794
    %v974 = vunpack.c.l.b16 %v795
    %v975 = vunpack.c.h.b16 %v795
    %v976 = vunpack.c.l.b16 %v796
    %v977 = vunpack.c.h.b16 %v796
    %v978 = vunpack.c.l.b16 %v797
    %v979 = vunpack.c.h.b16 %v797
    %v980 = vunpack.c.l.b16 %v798
    %v981 = vunpack.c.h.b16 %v798
    %v982 = vunpack.c.l.b16 %v799
    %v983 = vunpack.c.h.b16 %v799
    %v984 = vunpack.c.l.b16 %v800
    %v985 = vunpack.c.h.b16 %v800
    %v986 = vunpack.c.l.b16 %v801
    %v987 = vunpack.c.h.b16 %v801
    %v988 = vunpack.c.l.b16 %v802
    %v989 = vunpack.c.h.b16 %v802
    %v990 = vunpack.c.l.b16 %v803
    %v991 = vunpack.c.h.b16 %v803
    %v992 = vunpack.c.l.b16 %v804
    %v993 = vunpack.c.h.b16 %v804
    %v994 = vunpack.c.l.b16 %v805
    %v995 = vunpack.c.h.b16 %v805
    %v996 = vunpack.c.l.b16 %v806
    %v997 = vunpack.c.h.b16 %v806
    %v998 = vunpack.c.l.b16 %v807
    %v999 = vunpack.c.h.b16 %v807
    %v1000 = vunpack.c.l.b16 %v808
    %v1001 = vunpack.c.h.b16 %v808
    %v1002 = vunpack.c.l.b16 %v809
    %v1003 = vunpack.c.h.b16 %v809
    %v1004 = vunpack.c.l.b16 %v810
    %v1005 = vunpack.c.h.b16 %v810
    %v1006 = vunpack.c.l.b16 %v811
    %v1007 = vunpack.c.h.b16 %v811
    %v1008 = vunpack.c.l.b16 %v812
    %v1009 = vunpack.c.h.b16 %v812
    %v1010 = vunpack.c.l.b16 %v813
    %v1011 = vunpack.c.h.b16 %v813
    %v1012 = vunpack.c.l.b16 %v814
    %v1013 = vunpack.c.h.b16 %v814
    %v1014 = vunpack.c.l.b16 %v815
    %v1015 = vunpack.c.h.b16 %v815
    %v1016 = vunpack.c.l.b16 %v816
    %v1017 = vunpack.c.h.b16 %v816
    %v1018 = vunpack.c.l.b16 %v817
    %v1019 = vunpack.c.h.b16 %v817
    %v1020 = vunpack.c.l.b16 %v818
    %v1021 = vunpack.c.h.b16 %v818
    %v1022 = vunpack.c.l.b16 %v819
    %v1023 = vunpack.c.h.b16 %v819
    %v1024 = vunpack.c.l.b16 %v820
    %v1025 = vunpack.c.h.b16 %v820
    %v1026 = vunpack.c.l.b16 %v821
    %v1027 = vunpack.c.h.b16 %v821
    %v1028 = vunpack.c.l.b16 %v822
    %v1029 = vunpack.c.h.b16 %v822
    %v1030 = vunpack.c.l.b16 %v823
    %v1031 = vunpack.c.h.b16 %v823
    %v1032 = vunpack.c.l.b16 %v824
    %v1033 = vunpack.c.h.b16 %v824
    %v1034 = vunpack.c.l.b16 %v825
    %v1035 = vunpack.c.h.b16 %v825
    %v1036 = vunpack.c.l.b16 %v826
    %v1037 = vunpack.c.h.b16 %v826
    %v1038 = vunpack.c.l.b16 %v827
    %v1039 = vunpack.c.h.b16 %v827
    %v1040 = vunpack.c.l.b16 %v828
    %v1041 = vunpack.c.h.b16 %v828
    %v1042 = vunpack.c.l.b16 %v829
    %v1043 = vunpack.c.h.b16 %v829
    %v1044 = vunpack.c.l.b16 %v830
    %v1045 = vunpack.c.h.b16 %v830
    %v1046 = vunpack.c.l.b16 %v831
    %v1047 = vunpack.c.h.b16 %v831
    %v1048 = vunpack.c.l.b16 %v832
    %v1049 = vunpack.c.h.b16 %v832
    %v1050 = vunpack.c.l.b16 %v833
    %v1051 = vunpack.c.h.b16 %v833
    %v1052 = vunpack.c.l.b16 %v834
    %v1053 = vunpack.c.h.b16 %v834
    %v1054 = vunpack.c.l.b16 %v835
    %v1055 = vunpack.c.h.b16 %v835
    %v1056 = vunpack.c.l.b16 %v836
    %v1057 = vunpack.c.h.b16 %v836
    %v1058 = vunpack.c.l.b16 %v837
    %v1059 = vunpack.c.h.b16 %v837
    %v1060 = vunpack.c.l.b16 %v838
    %v1061 = vunpack.c.h.b16 %v838
    %v1062 = vunpack.c.l.b16 %v839
    %v1063 = vunpack.c.h.b16 %v839
    %v1064 = vunpack.c.l.b16 %v840
    %v1065 = vunpack.c.h.b16 %v840
    %v1066 = vunpack.c.l.b16 %v841
    %v1067 = vunpack.c.h.b16 %v841
    %v1068 = vunpack.c.l.b16 %v842
    %v1069 = vunpack.c.h.b16 %v842
    %v1070 = vunpack.c.l.b16 %v843
    %v1071 = vunpack.c.h.b16 %v843
    %v1072 = vunpack.c.l.b16 %v844
    %v1073 = vunpack.c.h.b16 %v844
    %v1074 = vunpack.c.l.b16 %v845
    %v1075 = vunpack.c.h.b16 %v845
    %v1076 = vunpack.c.l.b16 %v846
    %v1077 = vunpack.c.h.b16 %v846
    %v1078 = vunpack.c.l.b16 %v847
    %v1079 = vunpack.c.h.b16 %v847
    %v1080 = vunpack.c.l.b16 %v848
    %v1081 = vunpack.c.h.b16 %v848
    %v1082 = vunpack.c.l.b16 %v849
    %v1083 = vunpack.c.h.b16 %v849
    %v1084 = vpack.c.b16 %v964, %v956
    %v1085 = vpack.c.b16 %v965, %v957
    %v1086 = vpack.c.b16 %v966, %v958
    %v1087 = vpack.c.b16 %v967, %v959
    %v1088 = vpack.c.b16 %v968, %v960
    %v1089 = vpack.c.b16 %v969, %v961
    %v1090 = vpack.c.b16 %v970, %v962
    %v1091 = vpack.c.b16 %v971, %v963
    %v1092 = vpack.c.b16 %v980, %v972
    %v1093 = vpack.c.b16 %v981, %v973
    %v1094 = vpack.c.b16 %v982, %v974
    %v1095 = vpack.c.b16 %v983, %v975
    %v1096 = vpack.c.b16 %v984, %v976
    %v1097 = vpack.c.b16 %v985, %v977
    %v1098 = vpack.c.b16 %v986, %v978
    %v1099 = vpack.c.b16 %v987, %v979
    %v1100 = vpack.c.b16 %v996, %v988
    %v1101 = vpack.c.b16 %v997, %v989
    %v1102 = vpack.c.b16 %v998, %v990
    %v1103 = vpack.c.b16 %v999, %v991
    %v1104 = vpack.c.b16 %v1000, %v992
    %v1105 = vpack.c.b16 %v1001, %v993
    %v1106 = vpack.c.b16 %v1002, %v994
    %v1107 = vpack.c.b16 %v1003, %v995
    %v1108 = vpack.c.b16 %v1012, %v1004
    %v1109 = vpack.c.b16 %v1013, %v1005
    %v1110 = vpack.c.b16 %v1014, %v1006
    %v1111 = vpack.c.b16 %v1015, %v1007
    %v1112 = vpack.c.b16 %v1016, %v1008
    %v1113 = vpack.c.b16 %v1017, %v1009
    %v1114 = vpack.c.b16 %v1018, %v1010
    %v1115 = vpack.c.b16 %v1019, %v1011
    %v1116 = vpack.c.b16 %v1028, %v1020
    %v1117 = vpack.c.b16 %v1029, %v1021
    %v1118 = vpack.c.b16 %v1030, %v1022
    %v1119 = vpack.c.b16 %v1031, %v1023
    %v1120 = vpack.c.b16 %v1032, %v1024
    %v1121 = vpack.c.b16 %v1033, %v1025
    %v1122 = vpack.c.b16 %v1034, %v1026
    %v1123 = vpack.c.b16 %v1035, %v1027
    %v1124 = vpack.c.b16 %v1044, %v1036
    %v1125 = vpack.c.b16 %v1045, %v1037
    %v1126 = vpack.c.b16 %v1046, %v1038
    %v1127 = vpack.c.b16 %v1047, %v1039
    %v1128 = vpack.c.b16 %v1048, %v1040
    %v1129 = vpack.c.b16 %v1049, %v1041
    %v1130 = vpack.c.b16 %v1050, %v1042
    %v1131 = vpack.c.b16 %v1051, %v1043
    %v1132 = vpack.c.b16 %v1060, %v1052
    %v1133 = vpack.c.b16 %v1061, %v1053
    %v1134 = vpack.c.b16 %v1062, %v1054
    %v1135 = vpack.c.b16 %v1063, %v1055
    %v1136 = vpack.c.b16 %v1064, %v1056
    %v1137 = vpack.c.b16 %v1065, %v1057
    %v1138 = vpack.c.b16 %v1066, %v1058
    %v1139 = vpack.c.b16 %v1067, %v1059
    %v1140 = vpack.c.b16 %v1076, %v1068
    %v1141 = vpack.c.b16 %v1077, %v1069
    %v1142 = vpack.c.b16 %v1078, %v1070
    %v1143 = vpack.c.b16 %v1079, %v1071
    %v1144 = vpack.c.b16 %v1080, %v1072
    %v1145 = vpack.c.b16 %v1081, %v1073
    %v1146 = vpack.c.b16 %v1082, %v1074
    %v1147 = vpack.c.b16 %v1083, %v1075
    %1212 = vmatprep.subr.bf16.mxu0 %v1141
    %1213 = vmatpush1.bf16.msra.mxu0 %v1140
    %1214 = vmatprep.subr.bf16.mxu0 %v1133
    %1215 = vmatpush1.bf16.msra.mxu0 %v1132
    %1216 = vmatprep.subr.bf16.mxu0 %v1125
    %1217 = vmatpush1.bf16.msra.mxu0 %v1124
    %1218 = vmatprep.subr.bf16.mxu0 %v1117
    %1219 = vmatpush1.bf16.msra.mxu0 %v1116
    %1220 = vmatprep.subr.bf16.mxu0 %v1109
    %1221 = vmatpush1.bf16.msra.mxu0 %v1108
    %1222 = vmatprep.subr.bf16.mxu0 %v1101
    %1223 = vmatpush1.bf16.msra.mxu0 %v1100
    %1224 = vmatprep.subr.bf16.mxu0 %v1093
    %1225 = vmatpush1.bf16.msra.mxu0 %v1092
    %1226 = vmatprep.subr.bf16.mxu0 %v1085
    %1227 = vmatpush1.bf16.msra.mxu0 %v1084
    %1228 = vmatprep.subr.bf16.mxu0 0
    %1229 = vmatpush2.bf16.msra.mxu0 0
    %1230 = vmatprep.subr.bf16.mxu0 0
    %1231 = vmatpush2.bf16.msra.mxu0 0
    %1232 = vmatprep.subr.bf16.mxu0 0
    %1233 = vmatpush2.bf16.msra.mxu0 0
    %1234 = vmatprep.subr.bf16.mxu0 0
    %1235 = vmatpush2.bf16.msra.mxu0 0
    %1236 = vmatprep.subr.bf16.mxu0 0
    %1237 = vmatpush2.bf16.msra.mxu0 0
    %1238 = vmatprep.subr.bf16.mxu0 0
    %1239 = vmatpush2.bf16.msra.mxu0 0
    %1240 = vmatprep.subr.bf16.mxu0 0
    %1241 = vmatpush2.bf16.msra.mxu0 0
    %1242 = vmatprep.subr.bf16.mxu0 0
    %1243 = vmatpush2.bf16.msra.mxu0 0
    %1244 = vmatprep.mubr.bf16.mxu0 0
    %1245 = vmatmul.mubr.bf16.gmra.mxu0 %v785
    %v1246 = vpop.f32.mrf.mxu0
    %v1247 = vadd.f32 %v855, %v1246
    %v1248 = vpop.f32.mrf.mxu0
    %v1249 = vadd.f32 %v859, %v1248
    %v1250 = vpop.f32.mrf.mxu0
    %v1251 = vpop.f32.mrf.mxu0
    %1252 = vdwg.mxu0
    %1253 = vmatprep.subr.bf16.mxu0 %v1143
    %1254 = vmatpush1.bf16.msra.mxu0 %v1142
    %1255 = vmatprep.subr.bf16.mxu0 %v1135
    %1256 = vmatpush1.bf16.msra.mxu0 %v1134
    %1257 = vmatprep.subr.bf16.mxu0 %v1127
    %1258 = vmatpush1.bf16.msra.mxu0 %v1126
    %1259 = vmatprep.subr.bf16.mxu0 %v1119
    %1260 = vmatpush1.bf16.msra.mxu0 %v1118
    %1261 = vmatprep.subr.bf16.mxu0 %v1111
    %1262 = vmatpush1.bf16.msra.mxu0 %v1110
    %1263 = vmatprep.subr.bf16.mxu0 %v1103
    %1264 = vmatpush1.bf16.msra.mxu0 %v1102
    %1265 = vmatprep.subr.bf16.mxu0 %v1095
    %1266 = vmatpush1.bf16.msra.mxu0 %v1094
    %1267 = vmatprep.subr.bf16.mxu0 %v1087
    %1268 = vmatpush1.bf16.msra.mxu0 %v1086
    %1269 = vmatprep.subr.bf16.mxu0 0
    %1270 = vmatpush2.bf16.msra.mxu0 0
    %1271 = vmatprep.subr.bf16.mxu0 0
    %1272 = vmatpush2.bf16.msra.mxu0 0
    %1273 = vmatprep.subr.bf16.mxu0 0
    %1274 = vmatpush2.bf16.msra.mxu0 0
    %1275 = vmatprep.subr.bf16.mxu0 0
    %1276 = vmatpush2.bf16.msra.mxu0 0
    %1277 = vmatprep.subr.bf16.mxu0 0
    %1278 = vmatpush2.bf16.msra.mxu0 0
    %1279 = vmatprep.subr.bf16.mxu0 0
    %1280 = vmatpush2.bf16.msra.mxu0 0
    %1281 = vmatprep.subr.bf16.mxu0 0
    %1282 = vmatpush2.bf16.msra.mxu0 0
    %1283 = vmatprep.subr.bf16.mxu0 0
    %1284 = vmatpush2.bf16.msra.mxu0 0
    %1285 = vmatprep.mubr.bf16.mxu0 0
    %1286 = vmatmul.mubr.bf16.gmra.mxu0 %v785
    %v1287 = vpop.f32.mrf.mxu0
    %v1288 = vadd.f32 %v863, %v1287
    %v1289 = vpop.f32.mrf.mxu0
    %v1290 = vadd.f32 %v867, %v1289
    %v1291 = vpop.f32.mrf.mxu0
    %v1292 = vpop.f32.mrf.mxu0
    %1293 = vdwg.mxu0
    %1294 = vmatprep.subr.bf16.mxu0 %v1145
    %1295 = vmatpush1.bf16.msra.mxu0 %v1144
    %1296 = vmatprep.subr.bf16.mxu0 %v1137
    %1297 = vmatpush1.bf16.msra.mxu0 %v1136
    %1298 = vmatprep.subr.bf16.mxu0 %v1129
    %1299 = vmatpush1.bf16.msra.mxu0 %v1128
    %1300 = vmatprep.subr.bf16.mxu0 %v1121
    %1301 = vmatpush1.bf16.msra.mxu0 %v1120
    %1302 = vmatprep.subr.bf16.mxu0 %v1113
    %1303 = vmatpush1.bf16.msra.mxu0 %v1112
    %1304 = vmatprep.subr.bf16.mxu0 %v1105
    %1305 = vmatpush1.bf16.msra.mxu0 %v1104
    %1306 = vmatprep.subr.bf16.mxu0 %v1097
    %1307 = vmatpush1.bf16.msra.mxu0 %v1096
    %1308 = vmatprep.subr.bf16.mxu0 %v1089
    %1309 = vmatpush1.bf16.msra.mxu0 %v1088
    %1310 = vmatprep.subr.bf16.mxu0 0
    %1311 = vmatpush2.bf16.msra.mxu0 0
    %1312 = vmatprep.subr.bf16.mxu0 0
    %1313 = vmatpush2.bf16.msra.mxu0 0
    %1314 = vmatprep.subr.bf16.mxu0 0
    %1315 = vmatpush2.bf16.msra.mxu0 0
    %1316 = vmatprep.subr.bf16.mxu0 0
    %1317 = vmatpush2.bf16.msra.mxu0 0
    %1318 = vmatprep.subr.bf16.mxu0 0
    %1319 = vmatpush2.bf16.msra.mxu0 0
    %1320 = vmatprep.subr.bf16.mxu0 0
    %1321 = vmatpush2.bf16.msra.mxu0 0
    %1322 = vmatprep.subr.bf16.mxu0 0
    %1323 = vmatpush2.bf16.msra.mxu0 0
    %1324 = vmatprep.subr.bf16.mxu0 0
    %1325 = vmatpush2.bf16.msra.mxu0 0
    %1326 = vmatprep.mubr.bf16.mxu0 0
    %1327 = vmatmul.mubr.bf16.gmra.mxu0 %v785
    %v1328 = vpop.f32.mrf.mxu0
    %v1329 = vadd.f32 %v871, %v1328
    %v1330 = vpop.f32.mrf.mxu0
    %v1331 = vadd.f32 %v875, %v1330
    %v1332 = vpop.f32.mrf.mxu0
    %v1333 = vpop.f32.mrf.mxu0
    %1334 = vdwg.mxu0
    %1335 = vmatprep.subr.bf16.mxu0 %v1147
    %1336 = vmatpush1.bf16.msra.mxu0 %v1146
    %1337 = vmatprep.subr.bf16.mxu0 %v1139
    %1338 = vmatpush1.bf16.msra.mxu0 %v1138
    %1339 = vmatprep.subr.bf16.mxu0 %v1131
    %1340 = vmatpush1.bf16.msra.mxu0 %v1130
    %1341 = vmatprep.subr.bf16.mxu0 %v1123
    %1342 = vmatpush1.bf16.msra.mxu0 %v1122
    %1343 = vmatprep.subr.bf16.mxu0 %v1115
    %1344 = vmatpush1.bf16.msra.mxu0 %v1114
    %1345 = vmatprep.subr.bf16.mxu0 %v1107
    %1346 = vmatpush1.bf16.msra.mxu0 %v1106
    %1347 = vmatprep.subr.bf16.mxu0 %v1099
    %1348 = vmatpush1.bf16.msra.mxu0 %v1098
    %1349 = vmatprep.subr.bf16.mxu0 %v1091
    %1350 = vmatpush1.bf16.msra.mxu0 %v1090
    %1351 = vmatprep.subr.bf16.mxu0 0
    %1352 = vmatpush2.bf16.msra.mxu0 0
    %1353 = vmatprep.subr.bf16.mxu0 0
    %1354 = vmatpush2.bf16.msra.mxu0 0
    %1355 = vmatprep.subr.bf16.mxu0 0
    %1356 = vmatpush2.bf16.msra.mxu0 0
    %1357 = vmatprep.subr.bf16.mxu0 0
    %1358 = vmatpush2.bf16.msra.mxu0 0
    %1359 = vmatprep.subr.bf16.mxu0 0
    %1360 = vmatpush2.bf16.msra.mxu0 0
    %1361 = vmatprep.subr.bf16.mxu0 0
    %1362 = vmatpush2.bf16.msra.mxu0 0
    %1363 = vmatprep.subr.bf16.mxu0 0
    %1364 = vmatpush2.bf16.msra.mxu0 0
    %1365 = vmatprep.subr.bf16.mxu0 0
    %1366 = vmatpush2.bf16.msra.mxu0 0
    %1367 = vmatprep.mubr.bf16.mxu0 0
    %1368 = vmatmul.mubr.bf16.gmra.mxu0 %v785
    %v1369 = vpop.f32.mrf.mxu0
    %v1370 = vadd.f32 %v879, %v1369
    %v1371 = vpop.f32.mrf.mxu0
    %v1372 = vadd.f32 %v883, %v1371
    %v1373 = vpop.f32.mrf.mxu0
    %v1374 = vpop.f32.mrf.mxu0
    %1375 = vdwg.mxu0
    %1376 = vst [vmem:[#allocation10] sm:$0xff] %v1247
    %1377 = vst [vmem:[#allocation10 + $0x8] sm:$0xff] %v1249
    %1378 = vst [vmem:[#allocation10 + $0x10] sm:$0xff] %v1288
    %1379 = vst [vmem:[#allocation10 + $0x18] sm:$0xff] %v1290
    %1380 = vst [vmem:[#allocation10 + $0x20] sm:$0xff] %v1329
    %1381 = vst [vmem:[#allocation10 + $0x28] sm:$0xff] %v1331
    %1382 = vst [vmem:[#allocation10 + $0x30] sm:$0xff] %v1370
    %1383 = vst [vmem:[#allocation10 + $0x38] sm:$0xff] %v1372
    // Predicated region
    $region38: #{tpu_custom_call.1} parent=1 // pred_check
      _
    $region39: #{tpu_custom_call.1} parent=1 // pred_check_branch
      %1385 = sbr.rel (0) target = $region41
    $region40: #{tpu_custom_call.1} parent=1 // pred_region
      %s1387 = ssub.s32 1024, 1024
      %1388 = vsyncadd [#allocation4], %s1387
      %s1390 = sshll.u32 [#allocation10], 4
      %s1391 = int_to_ptr.vmem [resolvable:$true] %s1390
      %1393 = dma.vmem_to_hbm [thread:$0]  %s1391, 1024, %s5, [#allocation4]
    $region41: #{tpu_custom_call.1} parent=1 // pred_fallthru
      _
    // Predicated region
    $region42: #{tpu_custom_call.1} parent=1 // pred_check
      _
    $region43: #{tpu_custom_call.1} parent=1 // pred_check_branch
      %1395 = sbr.rel (0) target = $region45
    $region44: #{tpu_custom_call.1} parent=1 // pred_region
      %1396 = dma.done [#allocation4], 1024
    $region45: #{tpu_custom_call.1} parent=1 // pred_fallthru
      _
    %1397 = vsyncpa [#allocation3], 1
    %1398 = vsyncpa [#allocation6], 1
    %1399 = vsyncpa [#allocation9], 1
    %1400 = vsyncpa [#allocation4], 1

</llo_original>
